<compile_context>
chip_gen: v7x
topology: tpu7x:2x2x1
jax: 0.10.0
libtpu: 0.0.40
codegen_flags: <defaults>
</compile_context>

<pallas_src>
import numpy as np
import jax
import jax.numpy as jnp
from jax.experimental import pallas as pl
from jax.experimental.pallas import tpu as pltpu

HIDDEN = 128
INPUT_DIM = 1
# bf16 operands + f32 accumulation for the recurrent matmul (review item for
# v5e/v6e; also the native MXU dtype on v7x).  State / nonlinearities stay f32.
MATMUL_DTYPE = jnp.bfloat16


def seq_kernel(h0_ref, w_hh0_ref, b0_ref, w_hhf_ref, bf_ref, w_lin_ref,
               b_lin_ref, out_ref, h_hist_ref):
    """Autoregressive LSTM rollout, fully in VMEM.

    h0_ref    : (B, H)      gathered initial hidden states (f32)
    w_hh0_ref : (H, 4H)     unfolded hidden->gates weights, used at t=0   (bf16/f32)
    b0_ref    : (1, 4H)     unfolded bias b_ih + b_hh                      (f32)
    w_hhf_ref : (H, 4H)     folded weights w_hh + w_lin @ w_ih, t >= 1     (bf16/f32)
    bf_ref    : (1, 4H)     folded bias b + b_lin * w_ih                   (f32)
    w_lin_ref : (H, 1)      output projection                              (f32)
    b_lin_ref : (1, 1)      output projection bias                         (f32)
    out_ref   : (T*B, 1)    flat outputs (wrapper reshapes to (T, B, 1))
    h_hist_ref: (T*B, H)    VMEM scratch holding the h_t history
    """
    B, H = h0_ref.shape
    T = h_hist_ref.shape[0] // B
    w_dt = w_hhf_ref.dtype

    # ---- loop-invariant loads & hoisted broadcasts (done once, not per step)
    w_hh0 = w_hh0_ref[...]                                  # (H, 4H)
    w_hhf = w_hhf_ref[...]                                  # (H, 4H)
    b0 = jnp.broadcast_to(b0_ref[...], (B, 4 * H))          # (B, 4H)
    bf = jnp.broadcast_to(bf_ref[...], (B, 4 * H))          # (B, 4H)

    def lstm_cell(gates, c):
        # gate order i, f, g, o — matches PyTorch nn.LSTM
        i_g = jax.nn.sigmoid(gates[:, 0 * H:1 * H])
        f_g = jax.nn.sigmoid(gates[:, 1 * H:2 * H])
        g_g = jnp.tanh(gates[:, 2 * H:3 * H])
        o_g = jax.nn.sigmoid(gates[:, 3 * H:4 * H])
        c_new = f_g * c + i_g * g_g
        h_new = o_g * jnp.tanh(c_new)
        return h_new, c_new

    h = h0_ref[...]                                         # (B, H) f32
    c = jnp.zeros((B, H), jnp.float32)

    # ---- t = 0: LSTM input is zeros -> use the UNFOLDED weights / bias ------
    gates = jnp.dot(h.astype(w_dt), w_hh0,
                    preferred_element_type=jnp.float32) + b0
    h, c = lstm_cell(gates, c)
    h_hist_ref[pl.ds(0, B), :] = h

    # ---- t >= 1: x_t = Linear(h_{t-1}) folded into W_hh' / b' ---------------
    # Statically unrolled: T is a small compile-time constant; unrolling gives
    # the scheduler cross-step visibility and removes loop/branch overhead.
    for t in range(1, T):
        gates = jnp.dot(h.astype(w_dt), w_hhf,
                        preferred_element_type=jnp.float32) + bf
        h, c = lstm_cell(gates, c)
        h_hist_ref[pl.ds(t * B, B), :] = h

    # ---- batched output projection + single writeback (off the serial chain)
    y = jnp.dot(h_hist_ref[...], w_lin_ref[...],
                preferred_element_type=jnp.float32) + b_lin_ref[...]  # (T*B, 1)
    out_ref[...] = y


def sequence_forward(input_seq, label, params, matmul_dtype=MATMUL_DTYPE):
    """JAX wrapper mirroring Sequence.forward(input, label)."""
    T, B, _ = input_seq.shape                      # input only provides shapes
    H = params["h0"].shape[-1]

    # Glue: gather learned init hidden states by label index (the Python loop
    # with torch.cat in the original forward) + weight layout prep.
    h0 = params["h0"][0, label[:, 0], :]                     # (B, H)
    w_ih = params["w_ih"].T                                  # (1, 4H)
    w_hh = params["w_hh"].T                                  # (H, 4H)
    b = (params["b_ih"] + params["b_hh"]).reshape(1, -1)     # (1, 4H)
    w_lin = params["w_lin"].T                                # (H, 1)
    b_lin = params["b_lin"].reshape(1, 1)                    # (1, 1)

    # Fold the output Linear into the recurrence (valid for t >= 1, x_0 = 0):
    #   x_t * w_ih = (h_{t-1} @ w_lin + b_lin) * w_ih
    #              = h_{t-1} @ (w_lin @ w_ih) + b_lin * w_ih
    w_hh_fold = w_hh + w_lin @ w_ih                          # (H, 4H)
    b_fold = b + b_lin * w_ih                                # (1, 4H)

    out_flat = pl.pallas_call(
        seq_kernel,
        out_shape=jax.ShapeDtypeStruct((T * B, 1), jnp.float32),
        in_specs=[pl.BlockSpec(memory_space=pltpu.MemorySpace.VMEM)] * 7,
        out_specs=pl.BlockSpec(memory_space=pltpu.MemorySpace.VMEM),
        scratch_shapes=[pltpu.VMEM((T * B, H), jnp.float32)],
        # TODO(synk): if B ever grows to hundreds, add a batch grid axis with
        # dimension_semantics=("parallel",) so v7x's two TensorCores split it;
        # at B=8 a grid would be pure overhead.
    )(h0,
      w_hh.astype(matmul_dtype), b,
      w_hh_fold.astype(matmul_dtype), b_fold,
      w_lin, b_lin)
    return out_flat.reshape(T, B, 1)


def sequence_forward_ref(input_seq, label, params):
    """Pure-JAX reference (direct transcription of the PyTorch forward)."""
    T, B, _ = input_seq.shape
    H = params["h0"].shape[-1]
    h = params["h0"][0, label[:, 0], :]
    c = jnp.zeros((B, H), jnp.float32)
    x = jnp.zeros((B, INPUT_DIM), jnp.float32)
    w_ih, w_hh = params["w_ih"].T, params["w_hh"].T
    b = (params["b_ih"] + params["b_hh"]).reshape(1, -1)
    w_lin, b_lin = params["w_lin"].T, params["b_lin"].reshape(1, 1)
    outs = []
    for _ in range(T):
        gates = x * w_ih + h @ w_hh + b
        i_g = jax.nn.sigmoid(gates[:, 0 * H:1 * H])
        f_g = jax.nn.sigmoid(gates[:, 1 * H:2 * H])
        g_g = jnp.tanh(gates[:, 2 * H:3 * H])
        o_g = jax.nn.sigmoid(gates[:, 3 * H:4 * H])
        c = f_g * c + i_g * g_g
        h = o_g * jnp.tanh(c)
        y = h @ w_lin + b_lin
        outs.append(y)
        x = y
    return jnp.stack(outs, axis=0)


def init_params(key, num_data, hidden=HIDDEN, input_dim=INPUT_DIM):
    """Deterministic synthetic parameters (PyTorch-style U(-1/sqrt(H), 1/sqrt(H)))."""
    ks = jax.random.split(key, 8)
    bound = 1.0 / np.sqrt(hidden)
    u = lambda k, shape: jax.random.uniform(
        k, shape, dtype=jnp.float32, minval=-bound, maxval=bound)
    return {
        "w_ih":  u(ks[0], (4 * hidden, input_dim)),   # nn.LSTM weight_ih_l0
        "w_hh":  u(ks[1], (4 * hidden, hidden)),      # nn.LSTM weight_hh_l0
        "b_ih":  u(ks[2], (4 * hidden,)),
        "b_hh":  u(ks[3], (4 * hidden,)),
        "w_lin": u(ks[4], (input_dim, hidden)),       # nn.Linear(hidden, 1)
        "b_lin": u(ks[5], (input_dim,)),
        "h0":    jax.random.normal(ks[6], (1, num_data, hidden), jnp.float32) * 0.1,
    }


if __name__ == "__main__":
    key = jax.random.PRNGKey(0)
    k_par, k_inp = jax.random.split(key)

    num_data = 16     # db.numSequences
    batch = 8         # numDataInBatch
    seq_len = 8       # seqLength

    params = init_params(k_par, num_data)

    # `input` is only consulted for its shape in the PyTorch forward.
    input_seq = jax.random.normal(k_inp, (seq_len, batch, INPUT_DIM), jnp.float32)
    # label[i][0] is the sequence index used to pick the learned init hidden state.
    label = jnp.stack(
        [jnp.array([3, 0, 7, 12, 5, 9, 1, 14], jnp.int32),
         jnp.zeros((batch,), jnp.int32)], axis=1)           # (B, 2)

    ref = sequence_forward_ref(input_seq, label, params)

    # Exact-semantics check: f32 recurrent matmul path.
    out_f32 = sequence_forward(input_seq, label, params, matmul_dtype=jnp.float32)
    out_f32 = jax.block_until_ready(out_f32)
    np.testing.assert_allclose(np.asarray(out_f32), np.asarray(ref),
                               rtol=1e-3, atol=1e-3)

    # Fast path (default): bf16 MXU operands, f32 accumulation and f32 state.
    # Slightly looser tolerance accounts for bf16 operand rounding over the
    # 8-step recurrence (measured discrepancy ~1e-4).
    out = sequence_forward(input_seq, label, params)
    out = jax.block_until_ready(out)
    np.testing.assert_allclose(np.asarray(out), np.asarray(ref),
                               rtol=2e-3, atol=2e-3)

    assert out.shape == (seq_len, batch, 1)
    print("KERNEL_OK")
</pallas_src>

<mosaic_0001>
module attributes {stable_mosaic.version = 11 : i64} {
  func.func @seq_kernel(%arg0: memref<8x128xf32, #tpu.memory_space<vmem>>, %arg1: memref<128x512xf32, #tpu.memory_space<vmem>>, %arg2: memref<1x512xf32, #tpu.memory_space<vmem>>, %arg3: memref<128x512xf32, #tpu.memory_space<vmem>>, %arg4: memref<1x512xf32, #tpu.memory_space<vmem>>, %arg5: memref<128x1xf32, #tpu.memory_space<vmem>>, %arg6: memref<1x1xf32, #tpu.memory_space<vmem>>, %arg7: memref<64x1xf32, #tpu.memory_space<vmem>>, %arg8: memref<64x128xf32, #tpu.memory_space<vmem>>) attributes {dimension_semantics = [], scalar_prefetch = 0 : i64, scratch_operands = 1 : i64, tpu.core_type = #tpu.core_type<tc>} {
    %c0 = arith.constant 0 : index
    %c0_0 = arith.constant 0 : index
    %0 = vector.load %arg1[%c0, %c0_0] : memref<128x512xf32, #tpu.memory_space<vmem>>, vector<128x512xf32>
    %c0_1 = arith.constant 0 : index
    %c0_2 = arith.constant 0 : index
    %1 = vector.load %arg3[%c0_1, %c0_2] : memref<128x512xf32, #tpu.memory_space<vmem>>, vector<128x512xf32>
    %c0_3 = arith.constant 0 : index
    %c0_4 = arith.constant 0 : index
    %2 = vector.load %arg2[%c0_3, %c0_4] : memref<1x512xf32, #tpu.memory_space<vmem>>, vector<1x512xf32>
    %3 = vector.shape_cast %2 : vector<1x512xf32> to vector<1x512xf32>
    %4 = vector.broadcast %3 : vector<1x512xf32> to vector<8x512xf32>
    %c0_5 = arith.constant 0 : index
    %c0_6 = arith.constant 0 : index
    %5 = vector.load %arg4[%c0_5, %c0_6] : memref<1x512xf32, #tpu.memory_space<vmem>>, vector<1x512xf32>
    %6 = vector.shape_cast %5 : vector<1x512xf32> to vector<1x512xf32>
    %7 = vector.broadcast %6 : vector<1x512xf32> to vector<8x512xf32>
    %c0_7 = arith.constant 0 : index
    %c0_8 = arith.constant 0 : index
    %8 = vector.load %arg0[%c0_7, %c0_8] : memref<8x128xf32, #tpu.memory_space<vmem>>, vector<8x128xf32>
    %cst = arith.constant 0.000000e+00 : f32
    %9 = vector.broadcast %cst : f32 to vector<8x128xf32>
    %cst_9 = arith.constant dense<0.000000e+00> : vector<8x512xf32>
    %10 = tpu.matmul %8, %0, %cst_9 {dimension_numbers = #tpu.dot_dimension_numbers<[1], [0], [0], [1], [0, 0, 1, 1], [], []>} : vector<8x128xf32>, vector<128x512xf32>, vector<8x512xf32> -> vector<8x512xf32>
    %11 = arith.addf %10, %4 : vector<8x512xf32>
    %12 = vector.extract_strided_slice %11 {offsets = [0, 0], sizes = [8, 128], strides = [1, 1]} : vector<8x512xf32> to vector<8x128xf32>
    %13 = arith.negf %12 : vector<8x128xf32>
    %14 = math.exp %13 : vector<8x128xf32>
    %cst_10 = arith.constant 1.000000e+00 : f32
    %15 = vector.broadcast %cst_10 : f32 to vector<8x128xf32>
    %16 = arith.addf %15, %14 : vector<8x128xf32>
    %17 = arith.divf %15, %16 : vector<8x128xf32>
    %18 = vector.extract_strided_slice %11 {offsets = [0, 128], sizes = [8, 128], strides = [1, 1]} : vector<8x512xf32> to vector<8x128xf32>
    %19 = arith.negf %18 : vector<8x128xf32>
    %20 = math.exp %19 : vector<8x128xf32>
    %cst_11 = arith.constant 1.000000e+00 : f32
    %21 = vector.broadcast %cst_11 : f32 to vector<8x128xf32>
    %22 = arith.addf %21, %20 : vector<8x128xf32>
    %23 = arith.divf %21, %22 : vector<8x128xf32>
    %24 = vector.extract_strided_slice %11 {offsets = [0, 256], sizes = [8, 128], strides = [1, 1]} : vector<8x512xf32> to vector<8x128xf32>
    %25 = math.tanh %24 : vector<8x128xf32>
    %26 = vector.extract_strided_slice %11 {offsets = [0, 384], sizes = [8, 128], strides = [1, 1]} : vector<8x512xf32> to vector<8x128xf32>
    %27 = arith.negf %26 : vector<8x128xf32>
    %28 = math.exp %27 : vector<8x128xf32>
    %cst_12 = arith.constant 1.000000e+00 : f32
    %29 = vector.broadcast %cst_12 : f32 to vector<8x128xf32>
    %30 = arith.addf %29, %28 : vector<8x128xf32>
    %31 = arith.divf %29, %30 : vector<8x128xf32>
    %32 = arith.mulf %23, %9 : vector<8x128xf32>
    %33 = arith.mulf %17, %25 : vector<8x128xf32>
    %34 = arith.addf %32, %33 : vector<8x128xf32>
    %35 = math.tanh %34 : vector<8x128xf32>
    %36 = arith.mulf %31, %35 : vector<8x128xf32>
    %c0_13 = arith.constant 0 : index
    %c0_14 = arith.constant 0 : index
    %37 = vector.load %arg8[%c0_13, %c0_14] : memref<64x128xf32, #tpu.memory_space<vmem>>, vector<8x128xf32>
    tpu.vector_store %arg8[%c0_13, %c0_14], %36 {strides = array<i32>} : memref<64x128xf32, #tpu.memory_space<vmem>>, vector<8x128xf32>,
    %cst_15 = arith.constant dense<0.000000e+00> : vector<8x512xf32>
    %38 = tpu.matmul %36, %1, %cst_15 {dimension_numbers = #tpu.dot_dimension_numbers<[1], [0], [0], [1], [0, 0, 1, 1], [], []>} : vector<8x128xf32>, vector<128x512xf32>, vector<8x512xf32> -> vector<8x512xf32>
    %39 = arith.addf %38, %7 : vector<8x512xf32>
    %40 = vector.extract_strided_slice %39 {offsets = [0, 0], sizes = [8, 128], strides = [1, 1]} : vector<8x512xf32> to vector<8x128xf32>
    %41 = arith.negf %40 : vector<8x128xf32>
    %42 = math.exp %41 : vector<8x128xf32>
    %cst_16 = arith.constant 1.000000e+00 : f32
    %43 = vector.broadcast %cst_16 : f32 to vector<8x128xf32>
    %44 = arith.addf %43, %42 : vector<8x128xf32>
    %45 = arith.divf %43, %44 : vector<8x128xf32>
    %46 = vector.extract_strided_slice %39 {offsets = [0, 128], sizes = [8, 128], strides = [1, 1]} : vector<8x512xf32> to vector<8x128xf32>
    %47 = arith.negf %46 : vector<8x128xf32>
    %48 = math.exp %47 : vector<8x128xf32>
    %cst_17 = arith.constant 1.000000e+00 : f32
    %49 = vector.broadcast %cst_17 : f32 to vector<8x128xf32>
    %50 = arith.addf %49, %48 : vector<8x128xf32>
    %51 = arith.divf %49, %50 : vector<8x128xf32>
    %52 = vector.extract_strided_slice %39 {offsets = [0, 256], sizes = [8, 128], strides = [1, 1]} : vector<8x512xf32> to vector<8x128xf32>
    %53 = math.tanh %52 : vector<8x128xf32>
    %54 = vector.extract_strided_slice %39 {offsets = [0, 384], sizes = [8, 128], strides = [1, 1]} : vector<8x512xf32> to vector<8x128xf32>
    %55 = arith.negf %54 : vector<8x128xf32>
    %56 = math.exp %55 : vector<8x128xf32>
    %cst_18 = arith.constant 1.000000e+00 : f32
    %57 = vector.broadcast %cst_18 : f32 to vector<8x128xf32>
    %58 = arith.addf %57, %56 : vector<8x128xf32>
    %59 = arith.divf %57, %58 : vector<8x128xf32>
    %60 = arith.mulf %51, %34 : vector<8x128xf32>
    %61 = arith.mulf %45, %53 : vector<8x128xf32>
    %62 = arith.addf %60, %61 : vector<8x128xf32>
    %63 = math.tanh %62 : vector<8x128xf32>
    %64 = arith.mulf %59, %63 : vector<8x128xf32>
    %c8 = arith.constant 8 : index
    %c0_19 = arith.constant 0 : index
    %65 = vector.load %arg8[%c8, %c0_19] : memref<64x128xf32, #tpu.memory_space<vmem>>, vector<8x128xf32>
    tpu.vector_store %arg8[%c8, %c0_19], %64 {strides = array<i32>} : memref<64x128xf32, #tpu.memory_space<vmem>>, vector<8x128xf32>,
    %cst_20 = arith.constant dense<0.000000e+00> : vector<8x512xf32>
    %66 = tpu.matmul %64, %1, %cst_20 {dimension_numbers = #tpu.dot_dimension_numbers<[1], [0], [0], [1], [0, 0, 1, 1], [], []>} : vector<8x128xf32>, vector<128x512xf32>, vector<8x512xf32> -> vector<8x512xf32>
    %67 = arith.addf %66, %7 : vector<8x512xf32>
    %68 = vector.extract_strided_slice %67 {offsets = [0, 0], sizes = [8, 128], strides = [1, 1]} : vector<8x512xf32> to vector<8x128xf32>
    %69 = arith.negf %68 : vector<8x128xf32>
    %70 = math.exp %69 : vector<8x128xf32>
    %cst_21 = arith.constant 1.000000e+00 : f32
    %71 = vector.broadcast %cst_21 : f32 to vector<8x128xf32>
    %72 = arith.addf %71, %70 : vector<8x128xf32>
    %73 = arith.divf %71, %72 : vector<8x128xf32>
    %74 = vector.extract_strided_slice %67 {offsets = [0, 128], sizes = [8, 128], strides = [1, 1]} : vector<8x512xf32> to vector<8x128xf32>
    %75 = arith.negf %74 : vector<8x128xf32>
    %76 = math.exp %75 : vector<8x128xf32>
    %cst_22 = arith.constant 1.000000e+00 : f32
    %77 = vector.broadcast %cst_22 : f32 to vector<8x128xf32>
    %78 = arith.addf %77, %76 : vector<8x128xf32>
    %79 = arith.divf %77, %78 : vector<8x128xf32>
    %80 = vector.extract_strided_slice %67 {offsets = [0, 256], sizes = [8, 128], strides = [1, 1]} : vector<8x512xf32> to vector<8x128xf32>
    %81 = math.tanh %80 : vector<8x128xf32>
    %82 = vector.extract_strided_slice %67 {offsets = [0, 384], sizes = [8, 128], strides = [1, 1]} : vector<8x512xf32> to vector<8x128xf32>
    %83 = arith.negf %82 : vector<8x128xf32>
    %84 = math.exp %83 : vector<8x128xf32>
    %cst_23 = arith.constant 1.000000e+00 : f32
    %85 = vector.broadcast %cst_23 : f32 to vector<8x128xf32>
    %86 = arith.addf %85, %84 : vector<8x128xf32>
    %87 = arith.divf %85, %86 : vector<8x128xf32>
    %88 = arith.mulf %79, %62 : vector<8x128xf32>
    %89 = arith.mulf %73, %81 : vector<8x128xf32>
    %90 = arith.addf %88, %89 : vector<8x128xf32>
    %91 = math.tanh %90 : vector<8x128xf32>
    %92 = arith.mulf %87, %91 : vector<8x128xf32>
    %c16 = arith.constant 16 : index
    %c0_24 = arith.constant 0 : index
    %93 = vector.load %arg8[%c16, %c0_24] : memref<64x128xf32, #tpu.memory_space<vmem>>, vector<8x128xf32>
    tpu.vector_store %arg8[%c16, %c0_24], %92 {strides = array<i32>} : memref<64x128xf32, #tpu.memory_space<vmem>>, vector<8x128xf32>,
    %cst_25 = arith.constant dense<0.000000e+00> : vector<8x512xf32>
    %94 = tpu.matmul %92, %1, %cst_25 {dimension_numbers = #tpu.dot_dimension_numbers<[1], [0], [0], [1], [0, 0, 1, 1], [], []>} : vector<8x128xf32>, vector<128x512xf32>, vector<8x512xf32> -> vector<8x512xf32>
    %95 = arith.addf %94, %7 : vector<8x512xf32>
    %96 = vector.extract_strided_slice %95 {offsets = [0, 0], sizes = [8, 128], strides = [1, 1]} : vector<8x512xf32> to vector<8x128xf32>
    %97 = arith.negf %96 : vector<8x128xf32>
    %98 = math.exp %97 : vector<8x128xf32>
    %cst_26 = arith.constant 1.000000e+00 : f32
    %99 = vector.broadcast %cst_26 : f32 to vector<8x128xf32>
    %100 = arith.addf %99, %98 : vector<8x128xf32>
    %101 = arith.divf %99, %100 : vector<8x128xf32>
    %102 = vector.extract_strided_slice %95 {offsets = [0, 128], sizes = [8, 128], strides = [1, 1]} : vector<8x512xf32> to vector<8x128xf32>
    %103 = arith.negf %102 : vector<8x128xf32>
    %104 = math.exp %103 : vector<8x128xf32>
    %cst_27 = arith.constant 1.000000e+00 : f32
    %105 = vector.broadcast %cst_27 : f32 to vector<8x128xf32>
    %106 = arith.addf %105, %104 : vector<8x128xf32>
    %107 = arith.divf %105, %106 : vector<8x128xf32>
    %108 = vector.extract_strided_slice %95 {offsets = [0, 256], sizes = [8, 128], strides = [1, 1]} : vector<8x512xf32> to vector<8x128xf32>
    %109 = math.tanh %108 : vector<8x128xf32>
    %110 = vector.extract_strided_slice %95 {offsets = [0, 384], sizes = [8, 128], strides = [1, 1]} : vector<8x512xf32> to vector<8x128xf32>
    %111 = arith.negf %110 : vector<8x128xf32>
    %112 = math.exp %111 : vector<8x128xf32>
    %cst_28 = arith.constant 1.000000e+00 : f32
    %113 = vector.broadcast %cst_28 : f32 to vector<8x128xf32>
    %114 = arith.addf %113, %112 : vector<8x128xf32>
    %115 = arith.divf %113, %114 : vector<8x128xf32>
    %116 = arith.mulf %107, %90 : vector<8x128xf32>
    %117 = arith.mulf %101, %109 : vector<8x128xf32>
    %118 = arith.addf %116, %117 : vector<8x128xf32>
    %119 = math.tanh %118 : vector<8x128xf32>
    %120 = arith.mulf %115, %119 : vector<8x128xf32>
    %c24 = arith.constant 24 : index
    %c0_29 = arith.constant 0 : index
    %121 = vector.load %arg8[%c24, %c0_29] : memref<64x128xf32, #tpu.memory_space<vmem>>, vector<8x128xf32>
    tpu.vector_store %arg8[%c24, %c0_29], %120 {strides = array<i32>} : memref<64x128xf32, #tpu.memory_space<vmem>>, vector<8x128xf32>,
    %cst_30 = arith.constant dense<0.000000e+00> : vector<8x512xf32>
    %122 = tpu.matmul %120, %1, %cst_30 {dimension_numbers = #tpu.dot_dimension_numbers<[1], [0], [0], [1], [0, 0, 1, 1], [], []>} : vector<8x128xf32>, vector<128x512xf32>, vector<8x512xf32> -> vector<8x512xf32>
    %123 = arith.addf %122, %7 : vector<8x512xf32>
    %124 = vector.extract_strided_slice %123 {offsets = [0, 0], sizes = [8, 128], strides = [1, 1]} : vector<8x512xf32> to vector<8x128xf32>
    %125 = arith.negf %124 : vector<8x128xf32>
    %126 = math.exp %125 : vector<8x128xf32>
    %cst_31 = arith.constant 1.000000e+00 : f32
    %127 = vector.broadcast %cst_31 : f32 to vector<8x128xf32>
    %128 = arith.addf %127, %126 : vector<8x128xf32>
    %129 = arith.divf %127, %128 : vector<8x128xf32>
    %130 = vector.extract_strided_slice %123 {offsets = [0, 128], sizes = [8, 128], strides = [1, 1]} : vector<8x512xf32> to vector<8x128xf32>
    %131 = arith.negf %130 : vector<8x128xf32>
    %132 = math.exp %131 : vector<8x128xf32>
    %cst_32 = arith.constant 1.000000e+00 : f32
    %133 = vector.broadcast %cst_32 : f32 to vector<8x128xf32>
    %134 = arith.addf %133, %132 : vector<8x128xf32>
    %135 = arith.divf %133, %134 : vector<8x128xf32>
    %136 = vector.extract_strided_slice %123 {offsets = [0, 256], sizes = [8, 128], strides = [1, 1]} : vector<8x512xf32> to vector<8x128xf32>
    %137 = math.tanh %136 : vector<8x128xf32>
    %138 = vector.extract_strided_slice %123 {offsets = [0, 384], sizes = [8, 128], strides = [1, 1]} : vector<8x512xf32> to vector<8x128xf32>
    %139 = arith.negf %138 : vector<8x128xf32>
    %140 = math.exp %139 : vector<8x128xf32>
    %cst_33 = arith.constant 1.000000e+00 : f32
    %141 = vector.broadcast %cst_33 : f32 to vector<8x128xf32>
    %142 = arith.addf %141, %140 : vector<8x128xf32>
    %143 = arith.divf %141, %142 : vector<8x128xf32>
    %144 = arith.mulf %135, %118 : vector<8x128xf32>
    %145 = arith.mulf %129, %137 : vector<8x128xf32>
    %146 = arith.addf %144, %145 : vector<8x128xf32>
    %147 = math.tanh %146 : vector<8x128xf32>
    %148 = arith.mulf %143, %147 : vector<8x128xf32>
    %c32 = arith.constant 32 : index
    %c0_34 = arith.constant 0 : index
    %149 = vector.load %arg8[%c32, %c0_34] : memref<64x128xf32, #tpu.memory_space<vmem>>, vector<8x128xf32>
    tpu.vector_store %arg8[%c32, %c0_34], %148 {strides = array<i32>} : memref<64x128xf32, #tpu.memory_space<vmem>>, vector<8x128xf32>,
    %cst_35 = arith.constant dense<0.000000e+00> : vector<8x512xf32>
    %150 = tpu.matmul %148, %1, %cst_35 {dimension_numbers = #tpu.dot_dimension_numbers<[1], [0], [0], [1], [0, 0, 1, 1], [], []>} : vector<8x128xf32>, vector<128x512xf32>, vector<8x512xf32> -> vector<8x512xf32>
    %151 = arith.addf %150, %7 : vector<8x512xf32>
    %152 = vector.extract_strided_slice %151 {offsets = [0, 0], sizes = [8, 128], strides = [1, 1]} : vector<8x512xf32> to vector<8x128xf32>
    %153 = arith.negf %152 : vector<8x128xf32>
    %154 = math.exp %153 : vector<8x128xf32>
    %cst_36 = arith.constant 1.000000e+00 : f32
    %155 = vector.broadcast %cst_36 : f32 to vector<8x128xf32>
    %156 = arith.addf %155, %154 : vector<8x128xf32>
    %157 = arith.divf %155, %156 : vector<8x128xf32>
    %158 = vector.extract_strided_slice %151 {offsets = [0, 128], sizes = [8, 128], strides = [1, 1]} : vector<8x512xf32> to vector<8x128xf32>
    %159 = arith.negf %158 : vector<8x128xf32>
    %160 = math.exp %159 : vector<8x128xf32>
    %cst_37 = arith.constant 1.000000e+00 : f32
    %161 = vector.broadcast %cst_37 : f32 to vector<8x128xf32>
    %162 = arith.addf %161, %160 : vector<8x128xf32>
    %163 = arith.divf %161, %162 : vector<8x128xf32>
    %164 = vector.extract_strided_slice %151 {offsets = [0, 256], sizes = [8, 128], strides = [1, 1]} : vector<8x512xf32> to vector<8x128xf32>
    %165 = math.tanh %164 : vector<8x128xf32>
    %166 = vector.extract_strided_slice %151 {offsets = [0, 384], sizes = [8, 128], strides = [1, 1]} : vector<8x512xf32> to vector<8x128xf32>
    %167 = arith.negf %166 : vector<8x128xf32>
    %168 = math.exp %167 : vector<8x128xf32>
    %cst_38 = arith.constant 1.000000e+00 : f32
    %169 = vector.broadcast %cst_38 : f32 to vector<8x128xf32>
    %170 = arith.addf %169, %168 : vector<8x128xf32>
    %171 = arith.divf %169, %170 : vector<8x128xf32>
    %172 = arith.mulf %163, %146 : vector<8x128xf32>
    %173 = arith.mulf %157, %165 : vector<8x128xf32>
    %174 = arith.addf %172, %173 : vector<8x128xf32>
    %175 = math.tanh %174 : vector<8x128xf32>
    %176 = arith.mulf %171, %175 : vector<8x128xf32>
    %c40 = arith.constant 40 : index
    %c0_39 = arith.constant 0 : index
    %177 = vector.load %arg8[%c40, %c0_39] : memref<64x128xf32, #tpu.memory_space<vmem>>, vector<8x128xf32>
    tpu.vector_store %arg8[%c40, %c0_39], %176 {strides = array<i32>} : memref<64x128xf32, #tpu.memory_space<vmem>>, vector<8x128xf32>,
    %cst_40 = arith.constant dense<0.000000e+00> : vector<8x512xf32>
    %178 = tpu.matmul %176, %1, %cst_40 {dimension_numbers = #tpu.dot_dimension_numbers<[1], [0], [0], [1], [0, 0, 1, 1], [], []>} : vector<8x128xf32>, vector<128x512xf32>, vector<8x512xf32> -> vector<8x512xf32>
    %179 = arith.addf %178, %7 : vector<8x512xf32>
    %180 = vector.extract_strided_slice %179 {offsets = [0, 0], sizes = [8, 128], strides = [1, 1]} : vector<8x512xf32> to vector<8x128xf32>
    %181 = arith.negf %180 : vector<8x128xf32>
    %182 = math.exp %181 : vector<8x128xf32>
    %cst_41 = arith.constant 1.000000e+00 : f32
    %183 = vector.broadcast %cst_41 : f32 to vector<8x128xf32>
    %184 = arith.addf %183, %182 : vector<8x128xf32>
    %185 = arith.divf %183, %184 : vector<8x128xf32>
    %186 = vector.extract_strided_slice %179 {offsets = [0, 128], sizes = [8, 128], strides = [1, 1]} : vector<8x512xf32> to vector<8x128xf32>
    %187 = arith.negf %186 : vector<8x128xf32>
    %188 = math.exp %187 : vector<8x128xf32>
    %cst_42 = arith.constant 1.000000e+00 : f32
    %189 = vector.broadcast %cst_42 : f32 to vector<8x128xf32>
    %190 = arith.addf %189, %188 : vector<8x128xf32>
    %191 = arith.divf %189, %190 : vector<8x128xf32>
    %192 = vector.extract_strided_slice %179 {offsets = [0, 256], sizes = [8, 128], strides = [1, 1]} : vector<8x512xf32> to vector<8x128xf32>
    %193 = math.tanh %192 : vector<8x128xf32>
    %194 = vector.extract_strided_slice %179 {offsets = [0, 384], sizes = [8, 128], strides = [1, 1]} : vector<8x512xf32> to vector<8x128xf32>
    %195 = arith.negf %194 : vector<8x128xf32>
    %196 = math.exp %195 : vector<8x128xf32>
    %cst_43 = arith.constant 1.000000e+00 : f32
    %197 = vector.broadcast %cst_43 : f32 to vector<8x128xf32>
    %198 = arith.addf %197, %196 : vector<8x128xf32>
    %199 = arith.divf %197, %198 : vector<8x128xf32>
    %200 = arith.mulf %191, %174 : vector<8x128xf32>
    %201 = arith.mulf %185, %193 : vector<8x128xf32>
    %202 = arith.addf %200, %201 : vector<8x128xf32>
    %203 = math.tanh %202 : vector<8x128xf32>
    %204 = arith.mulf %199, %203 : vector<8x128xf32>
    %c48 = arith.constant 48 : index
    %c0_44 = arith.constant 0 : index
    %205 = vector.load %arg8[%c48, %c0_44] : memref<64x128xf32, #tpu.memory_space<vmem>>, vector<8x128xf32>
    tpu.vector_store %arg8[%c48, %c0_44], %204 {strides = array<i32>} : memref<64x128xf32, #tpu.memory_space<vmem>>, vector<8x128xf32>,
    %cst_45 = arith.constant dense<0.000000e+00> : vector<8x512xf32>
    %206 = tpu.matmul %204, %1, %cst_45 {dimension_numbers = #tpu.dot_dimension_numbers<[1], [0], [0], [1], [0, 0, 1, 1], [], []>} : vector<8x128xf32>, vector<128x512xf32>, vector<8x512xf32> -> vector<8x512xf32>
    %207 = arith.addf %206, %7 : vector<8x512xf32>
    %208 = vector.extract_strided_slice %207 {offsets = [0, 0], sizes = [8, 128], strides = [1, 1]} : vector<8x512xf32> to vector<8x128xf32>
    %209 = arith.negf %208 : vector<8x128xf32>
    %210 = math.exp %209 : vector<8x128xf32>
    %cst_46 = arith.constant 1.000000e+00 : f32
    %211 = vector.broadcast %cst_46 : f32 to vector<8x128xf32>
    %212 = arith.addf %211, %210 : vector<8x128xf32>
    %213 = arith.divf %211, %212 : vector<8x128xf32>
    %214 = vector.extract_strided_slice %207 {offsets = [0, 128], sizes = [8, 128], strides = [1, 1]} : vector<8x512xf32> to vector<8x128xf32>
    %215 = arith.negf %214 : vector<8x128xf32>
    %216 = math.exp %215 : vector<8x128xf32>
    %cst_47 = arith.constant 1.000000e+00 : f32
    %217 = vector.broadcast %cst_47 : f32 to vector<8x128xf32>
    %218 = arith.addf %217, %216 : vector<8x128xf32>
    %219 = arith.divf %217, %218 : vector<8x128xf32>
    %220 = vector.extract_strided_slice %207 {offsets = [0, 256], sizes = [8, 128], strides = [1, 1]} : vector<8x512xf32> to vector<8x128xf32>
    %221 = math.tanh %220 : vector<8x128xf32>
    %222 = vector.extract_strided_slice %207 {offsets = [0, 384], sizes = [8, 128], strides = [1, 1]} : vector<8x512xf32> to vector<8x128xf32>
    %223 = arith.negf %222 : vector<8x128xf32>
    %224 = math.exp %223 : vector<8x128xf32>
    %cst_48 = arith.constant 1.000000e+00 : f32
    %225 = vector.broadcast %cst_48 : f32 to vector<8x128xf32>
    %226 = arith.addf %225, %224 : vector<8x128xf32>
    %227 = arith.divf %225, %226 : vector<8x128xf32>
    %228 = arith.mulf %219, %202 : vector<8x128xf32>
    %229 = arith.mulf %213, %221 : vector<8x128xf32>
    %230 = arith.addf %228, %229 : vector<8x128xf32>
    %231 = math.tanh %230 : vector<8x128xf32>
    %232 = arith.mulf %227, %231 : vector<8x128xf32>
    %c56 = arith.constant 56 : index
    %c0_49 = arith.constant 0 : index
    %233 = vector.load %arg8[%c56, %c0_49] : memref<64x128xf32, #tpu.memory_space<vmem>>, vector<8x128xf32>
    tpu.vector_store %arg8[%c56, %c0_49], %232 {strides = array<i32>} : memref<64x128xf32, #tpu.memory_space<vmem>>, vector<8x128xf32>,
    %c0_50 = arith.constant 0 : index
    %c0_51 = arith.constant 0 : index
    %234 = vector.load %arg8[%c0_50, %c0_51] : memref<64x128xf32, #tpu.memory_space<vmem>>, vector<64x128xf32>
    %c0_52 = arith.constant 0 : index
    %c0_53 = arith.constant 0 : index
    %235 = vector.load %arg5[%c0_52, %c0_53] : memref<128x1xf32, #tpu.memory_space<vmem>>, vector<128x1xf32>
    %cst_54 = arith.constant dense<0.000000e+00> : vector<64x1xf32>
    %236 = tpu.matmul %234, %235, %cst_54 {dimension_numbers = #tpu.dot_dimension_numbers<[1], [0], [0], [1], [0, 0, 1, 1], [], []>} : vector<64x128xf32>, vector<128x1xf32>, vector<64x1xf32> -> vector<64x1xf32>
    %c0_55 = arith.constant 0 : index
    %c0_56 = arith.constant 0 : index
    %237 = vector.load %arg6[%c0_55, %c0_56] : memref<1x1xf32, #tpu.memory_space<vmem>>, vector<1x1xf32>
    %238 = vector.broadcast %237 : vector<1x1xf32> to vector<64x1xf32>
    %239 = arith.addf %236, %238 : vector<64x1xf32>
    %c0_57 = arith.constant 0 : index
    %c0_58 = arith.constant 0 : index
    %240 = vector.load %arg7[%c0_57, %c0_58] : memref<64x1xf32, #tpu.memory_space<vmem>>, vector<64x1xf32>
    tpu.vector_store %arg7[%c0_57, %c0_58], %239 {strides = array<i32>} : memref<64x1xf32, #tpu.memory_space<vmem>>, vector<64x1xf32>,
    return
  }
}

</mosaic_0001>

<llo_original>
// kernel: tpu_custom_call.1
$region0: #{tpu_custom_call.1}
  #allocation0 [shape = 'u32[]', space=smem, size = 0x4, offset = 0x4, fixed_abs, tag = 'smem constant byte address 0x4 - core index']
  #allocation1 [shape = 'u32[144,128]{1,0:T(1,128)}', space=vmem, size = 0x12000, scoped, tag = 'internal scratch']
  #allocation2 [shape = 'f32[64,128]{1,0:T(8,128)}', space=vmem, size = 0x8000, scoped, tag = 'scratch operand']
  #allocation3 [shape = 'f32[1,1]{1,0:T(1,128)S(1)}', space=vmem, size = 0x200, scoped, tag = 'scoped memory for tpu_custom_call.1']
  %s0 = inlined_call_operand.vmem [shape: f32[8,128], index: 0, kind: input, shape index: {}]
  %s1 = inlined_call_operand.hbm [shape: f32[128,512], index: 1, kind: input, shape index: {}]
  %s2 = inlined_call_operand.vmem [shape: f32[1,512], index: 2, kind: input, shape index: {}]
  %s3 = inlined_call_operand.hbm [shape: f32[128,512], index: 3, kind: input, shape index: {}]
  %s4 = inlined_call_operand.vmem [shape: f32[1,512], index: 4, kind: input, shape index: {}]
  %s5 = inlined_call_operand.vmem [shape: f32[128,1], index: 5, kind: input, shape index: {}]
  %s6 = inlined_call_operand.<no memory space> [shape: f32[1,1], index: 6, kind: input, shape index: {}]
  %s7 = inlined_call_operand.vmem [shape: f32[64,1], index: 7, kind: output, shape index: {}]
  %s8 = sld [smem:[#allocation0]]
  $region46: #{tpu_custom_call.1} parent=0
    _
  %s10 = ssub.s32 1, %s8
  %s11 = scalar_select 0, %s10, %s8
  %v12 = vstv %s6
  %13 = vst [vmem:[#allocation3] sm:$0x1] %v12
  $region1: #{tpu_custom_call.1} parent=0
    #allocation4 [shape = 'u8[262144]{0}', space=vmem, size = 0x40000, scoped, tag = 'input window, operand 1, single buffered']
    #allocation5 [shape = 's32[1]{0}', space=sflag, size = 0x4, scoped, tag = 'scoped memory for tpu_custom_call.1']
    #allocation6 [shape = 'u8[262144]{0}', space=vmem, size = 0x40000, scoped, tag = 'input window, operand 3, single buffered']
    #allocation7 [shape = 's32[1]{0}', space=sflag, size = 0x4, scoped, tag = 'scoped memory for tpu_custom_call.1']
    %14 = vsyncpa [#allocation5], 0
    %15 = vsyncpa [#allocation7], 0
    // Predicated region
    $region2: #{tpu_custom_call.1} parent=1 // pred_check
      _
    $region3: #{tpu_custom_call.1} parent=1 // pred_check_branch
      %17 = sbr.rel (0) target = $region5
    $region4: #{tpu_custom_call.1} parent=1 // pred_region
      _
    $region5: #{tpu_custom_call.1} parent=1 // pred_fallthru
      _
    // Predicated region
    $region6: #{tpu_custom_call.1} parent=1 // pred_check
      _
    $region7: #{tpu_custom_call.1} parent=1 // pred_check_branch
      %19 = sbr.rel (0) target = $region9
    $region8: #{tpu_custom_call.1} parent=1 // pred_region
      %s21 = ssub.s32 8192, 8192
      %22 = vsyncadd [#allocation5], %s21
      %s23 = sshll.u32 [#allocation4], 4
      %s24 = int_to_ptr.vmem [resolvable:$true] %s23
      %29 = dma.hbm_to_vmem [thread:$0]  %s1, 8192, %s24, [#allocation5], 512, 512, 32
    $region9: #{tpu_custom_call.1} parent=1 // pred_fallthru
      _
    // Predicated region
    $region10: #{tpu_custom_call.1} parent=1 // pred_check
      _
    $region11: #{tpu_custom_call.1} parent=1 // pred_check_branch
      %31 = sbr.rel (0) target = $region13
    $region12: #{tpu_custom_call.1} parent=1 // pred_region
      _
    $region13: #{tpu_custom_call.1} parent=1 // pred_fallthru
      _
    // Predicated region
    $region14: #{tpu_custom_call.1} parent=1 // pred_check
      _
    $region15: #{tpu_custom_call.1} parent=1 // pred_check_branch
      %33 = sbr.rel (0) target = $region17
    $region16: #{tpu_custom_call.1} parent=1 // pred_region
      %s35 = ssub.s32 8192, 8192
      %36 = vsyncadd [#allocation7], %s35
      %s37 = sshll.u32 [#allocation6], 4
      %s38 = int_to_ptr.vmem [resolvable:$true] %s37
      %43 = dma.hbm_to_vmem [thread:$0]  %s3, 8192, %s38, [#allocation7], 512, 512, 32
    $region17: #{tpu_custom_call.1} parent=1 // pred_fallthru
      _
    // Predicated region
    $region18: #{tpu_custom_call.1} parent=1 // pred_check
      _
    $region19: #{tpu_custom_call.1} parent=1 // pred_check_branch
      %45 = sbr.rel (0) target = $region21
    $region20: #{tpu_custom_call.1} parent=1 // pred_region
      _
    $region21: #{tpu_custom_call.1} parent=1 // pred_fallthru
      _
    // Predicated region
    $region22: #{tpu_custom_call.1} parent=1 // pred_check
      _
    $region23: #{tpu_custom_call.1} parent=1 // pred_check_branch
      %47 = sbr.rel (0) target = $region25
    $region24: #{tpu_custom_call.1} parent=1 // pred_region
      _
    $region25: #{tpu_custom_call.1} parent=1 // pred_fallthru
      _
    // Predicated region
    $region26: #{tpu_custom_call.1} parent=1 // pred_check
      _
    $region27: #{tpu_custom_call.1} parent=1 // pred_check_branch
      %49 = sbr.rel (0) target = $region29
    $region28: #{tpu_custom_call.1} parent=1 // pred_region
      _
    $region29: #{tpu_custom_call.1} parent=1 // pred_fallthru
      _
    // Predicated region
    $region30: #{tpu_custom_call.1} parent=1 // pred_check
      _
    $region31: #{tpu_custom_call.1} parent=1 // pred_check_branch
      %51 = sbr.rel (0) target = $region33
    $region32: #{tpu_custom_call.1} parent=1 // pred_region
      %52 = dma.done [#allocation5], 8192
    $region33: #{tpu_custom_call.1} parent=1 // pred_fallthru
      _
    // Predicated region
    $region34: #{tpu_custom_call.1} parent=1 // pred_check
      _
    $region35: #{tpu_custom_call.1} parent=1 // pred_check_branch
      %54 = sbr.rel (0) target = $region37
    $region36: #{tpu_custom_call.1} parent=1 // pred_region
      %55 = dma.done [#allocation7], 8192
    $region37: #{tpu_custom_call.1} parent=1 // pred_fallthru
      _
    %v56 = vld [vmem:[#allocation4] sm:$0xff]
    %v57 = vld [vmem:[#allocation4 + $0x8] sm:$0xff]
    %v58 = vld [vmem:[#allocation4 + $0x10] sm:$0xff]
    %v59 = vld [vmem:[#allocation4 + $0x18] sm:$0xff]
    %v60 = vld [vmem:[#allocation4 + $0x20] sm:$0xff]
    %v61 = vld [vmem:[#allocation4 + $0x28] sm:$0xff]
    %v62 = vld [vmem:[#allocation4 + $0x30] sm:$0xff]
    %v63 = vld [vmem:[#allocation4 + $0x38] sm:$0xff]
    %v64 = vld [vmem:[#allocation4 + $0x40] sm:$0xff]
    %v65 = vld [vmem:[#allocation4 + $0x48] sm:$0xff]
    %v66 = vld [vmem:[#allocation4 + $0x50] sm:$0xff]
    %v67 = vld [vmem:[#allocation4 + $0x58] sm:$0xff]
    %v68 = vld [vmem:[#allocation4 + $0x60] sm:$0xff]
    %v69 = vld [vmem:[#allocation4 + $0x68] sm:$0xff]
    %v70 = vld [vmem:[#allocation4 + $0x70] sm:$0xff]
    %v71 = vld [vmem:[#allocation4 + $0x78] sm:$0xff]
    %v72 = vld [vmem:[#allocation4 + $0x80] sm:$0xff]
    %v73 = vld [vmem:[#allocation4 + $0x88] sm:$0xff]
    %v74 = vld [vmem:[#allocation4 + $0x90] sm:$0xff]
    %v75 = vld [vmem:[#allocation4 + $0x98] sm:$0xff]
    %v76 = vld [vmem:[#allocation4 + $0xa0] sm:$0xff]
    %v77 = vld [vmem:[#allocation4 + $0xa8] sm:$0xff]
    %v78 = vld [vmem:[#allocation4 + $0xb0] sm:$0xff]
    %v79 = vld [vmem:[#allocation4 + $0xb8] sm:$0xff]
    %v80 = vld [vmem:[#allocation4 + $0xc0] sm:$0xff]
    %v81 = vld [vmem:[#allocation4 + $0xc8] sm:$0xff]
    %v82 = vld [vmem:[#allocation4 + $0xd0] sm:$0xff]
    %v83 = vld [vmem:[#allocation4 + $0xd8] sm:$0xff]
    %v84 = vld [vmem:[#allocation4 + $0xe0] sm:$0xff]
    %v85 = vld [vmem:[#allocation4 + $0xe8] sm:$0xff]
    %v86 = vld [vmem:[#allocation4 + $0xf0] sm:$0xff]
    %v87 = vld [vmem:[#allocation4 + $0xf8] sm:$0xff]
    %v88 = vld [vmem:[#allocation4 + $0x100] sm:$0xff]
    %v89 = vld [vmem:[#allocation4 + $0x108] sm:$0xff]
    %v90 = vld [vmem:[#allocation4 + $0x110] sm:$0xff]
    %v91 = vld [vmem:[#allocation4 + $0x118] sm:$0xff]
    %v92 = vld [vmem:[#allocation4 + $0x120] sm:$0xff]
    %v93 = vld [vmem:[#allocation4 + $0x128] sm:$0xff]
    %v94 = vld [vmem:[#allocation4 + $0x130] sm:$0xff]
    %v95 = vld [vmem:[#allocation4 + $0x138] sm:$0xff]
    %v96 = vld [vmem:[#allocation4 + $0x140] sm:$0xff]
    %v97 = vld [vmem:[#allocation4 + $0x148] sm:$0xff]
    %v98 = vld [vmem:[#allocation4 + $0x150] sm:$0xff]
    %v99 = vld [vmem:[#allocation4 + $0x158] sm:$0xff]
    %v100 = vld [vmem:[#allocation4 + $0x160] sm:$0xff]
    %v101 = vld [vmem:[#allocation4 + $0x168] sm:$0xff]
    %v102 = vld [vmem:[#allocation4 + $0x170] sm:$0xff]
    %v103 = vld [vmem:[#allocation4 + $0x178] sm:$0xff]
    %v104 = vld [vmem:[#allocation4 + $0x180] sm:$0xff]
    %v105 = vld [vmem:[#allocation4 + $0x188] sm:$0xff]
    %v106 = vld [vmem:[#allocation4 + $0x190] sm:$0xff]
    %v107 = vld [vmem:[#allocation4 + $0x198] sm:$0xff]
    %v108 = vld [vmem:[#allocation4 + $0x1a0] sm:$0xff]
    %v109 = vld [vmem:[#allocation4 + $0x1a8] sm:$0xff]
    %v110 = vld [vmem:[#allocation4 + $0x1b0] sm:$0xff]
    %v111 = vld [vmem:[#allocation4 + $0x1b8] sm:$0xff]
    %v112 = vld [vmem:[#allocation4 + $0x1c0] sm:$0xff]
    %v113 = vld [vmem:[#allocation4 + $0x1c8] sm:$0xff]
    %v114 = vld [vmem:[#allocation4 + $0x1d0] sm:$0xff]
    %v115 = vld [vmem:[#allocation4 + $0x1d8] sm:$0xff]
    %v116 = vld [vmem:[#allocation4 + $0x1e0] sm:$0xff]
    %v117 = vld [vmem:[#allocation4 + $0x1e8] sm:$0xff]
    %v118 = vld [vmem:[#allocation4 + $0x1f0] sm:$0xff]
    %v119 = vld [vmem:[#allocation4 + $0x1f8] sm:$0xff]
    %v120 = vld [vmem:[#allocation6] sm:$0xff]
    %v121 = vld [vmem:[#allocation6 + $0x8] sm:$0xff]
    %v122 = vld [vmem:[#allocation6 + $0x10] sm:$0xff]
    %v123 = vld [vmem:[#allocation6 + $0x18] sm:$0xff]
    %v124 = vld [vmem:[#allocation6 + $0x20] sm:$0xff]
    %v125 = vld [vmem:[#allocation6 + $0x28] sm:$0xff]
    %v126 = vld [vmem:[#allocation6 + $0x30] sm:$0xff]
    %v127 = vld [vmem:[#allocation6 + $0x38] sm:$0xff]
    %v128 = vld [vmem:[#allocation6 + $0x40] sm:$0xff]
    %v129 = vld [vmem:[#allocation6 + $0x48] sm:$0xff]
    %v130 = vld [vmem:[#allocation6 + $0x50] sm:$0xff]
    %v131 = vld [vmem:[#allocation6 + $0x58] sm:$0xff]
    %v132 = vld [vmem:[#allocation6 + $0x60] sm:$0xff]
    %v133 = vld [vmem:[#allocation6 + $0x68] sm:$0xff]
    %v134 = vld [vmem:[#allocation6 + $0x70] sm:$0xff]
    %v135 = vld [vmem:[#allocation6 + $0x78] sm:$0xff]
    %v136 = vld [vmem:[#allocation6 + $0x80] sm:$0xff]
    %v137 = vld [vmem:[#allocation6 + $0x88] sm:$0xff]
    %v138 = vld [vmem:[#allocation6 + $0x90] sm:$0xff]
    %v139 = vld [vmem:[#allocation6 + $0x98] sm:$0xff]
    %v140 = vld [vmem:[#allocation6 + $0xa0] sm:$0xff]
    %v141 = vld [vmem:[#allocation6 + $0xa8] sm:$0xff]
    %v142 = vld [vmem:[#allocation6 + $0xb0] sm:$0xff]
    %v143 = vld [vmem:[#allocation6 + $0xb8] sm:$0xff]
    %v144 = vld [vmem:[#allocation6 + $0xc0] sm:$0xff]
    %v145 = vld [vmem:[#allocation6 + $0xc8] sm:$0xff]
    %v146 = vld [vmem:[#allocation6 + $0xd0] sm:$0xff]
    %v147 = vld [vmem:[#allocation6 + $0xd8] sm:$0xff]
    %v148 = vld [vmem:[#allocation6 + $0xe0] sm:$0xff]
    %v149 = vld [vmem:[#allocation6 + $0xe8] sm:$0xff]
    %v150 = vld [vmem:[#allocation6 + $0xf0] sm:$0xff]
    %v151 = vld [vmem:[#allocation6 + $0xf8] sm:$0xff]
    %v152 = vld [vmem:[#allocation6 + $0x100] sm:$0xff]
    %v153 = vld [vmem:[#allocation6 + $0x108] sm:$0xff]
    %v154 = vld [vmem:[#allocation6 + $0x110] sm:$0xff]
    %v155 = vld [vmem:[#allocation6 + $0x118] sm:$0xff]
    %v156 = vld [vmem:[#allocation6 + $0x120] sm:$0xff]
    %v157 = vld [vmem:[#allocation6 + $0x128] sm:$0xff]
    %v158 = vld [vmem:[#allocation6 + $0x130] sm:$0xff]
    %v159 = vld [vmem:[#allocation6 + $0x138] sm:$0xff]
    %v160 = vld [vmem:[#allocation6 + $0x140] sm:$0xff]
    %v161 = vld [vmem:[#allocation6 + $0x148] sm:$0xff]
    %v162 = vld [vmem:[#allocation6 + $0x150] sm:$0xff]
    %v163 = vld [vmem:[#allocation6 + $0x158] sm:$0xff]
    %v164 = vld [vmem:[#allocation6 + $0x160] sm:$0xff]
    %v165 = vld [vmem:[#allocation6 + $0x168] sm:$0xff]
    %v166 = vld [vmem:[#allocation6 + $0x170] sm:$0xff]
    %v167 = vld [vmem:[#allocation6 + $0x178] sm:$0xff]
    %v168 = vld [vmem:[#allocation6 + $0x180] sm:$0xff]
    %v169 = vld [vmem:[#allocation6 + $0x188] sm:$0xff]
    %v170 = vld [vmem:[#allocation6 + $0x190] sm:$0xff]
    %v171 = vld [vmem:[#allocation6 + $0x198] sm:$0xff]
    %v172 = vld [vmem:[#allocation6 + $0x1a0] sm:$0xff]
    %v173 = vld [vmem:[#allocation6 + $0x1a8] sm:$0xff]
    %v174 = vld [vmem:[#allocation6 + $0x1b0] sm:$0xff]
    %v175 = vld [vmem:[#allocation6 + $0x1b8] sm:$0xff]
    %v176 = vld [vmem:[#allocation6 + $0x1c0] sm:$0xff]
    %v177 = vld [vmem:[#allocation6 + $0x1c8] sm:$0xff]
    %v178 = vld [vmem:[#allocation6 + $0x1d0] sm:$0xff]
    %v179 = vld [vmem:[#allocation6 + $0x1d8] sm:$0xff]
    %v180 = vld [vmem:[#allocation6 + $0x1e0] sm:$0xff]
    %v181 = vld [vmem:[#allocation6 + $0x1e8] sm:$0xff]
    %v182 = vld [vmem:[#allocation6 + $0x1f0] sm:$0xff]
    %v183 = vld [vmem:[#allocation6 + $0x1f8] sm:$0xff]
    %v184 = vld [vmem:[%s2] sm:$0xf]
    %v186 = vlaneseq
    %v187 = vshrl.u32 %v186, 7
    %v188 = vsub.s32 0, %v187
    %v189 = vrot.slane %v184, %v188
    %v190 = vlaneseq
    %v191 = vshrl.u32 %v190, 7
    %v192 = vsub.s32 1, %v191
    %v193 = vrot.slane %v184, %v192
    %v194 = vlaneseq
    %v195 = vshrl.u32 %v194, 7
    %v196 = vsub.s32 2, %v195
    %v197 = vrot.slane %v184, %v196
    %v198 = vlaneseq
    %v199 = vshrl.u32 %v198, 7
    %v200 = vsub.s32 3, %v199
    %v201 = vrot.slane %v184, %v200
    %v206 = vld [vmem:[%s4] sm:$0xf]
    %v208 = vlaneseq
    %v209 = vshrl.u32 %v208, 7
    %v210 = vsub.s32 0, %v209
    %v211 = vrot.slane %v206, %v210
    %v212 = vlaneseq
    %v213 = vshrl.u32 %v212, 7
    %v214 = vsub.s32 1, %v213
    %v215 = vrot.slane %v206, %v214
    %v216 = vlaneseq
    %v217 = vshrl.u32 %v216, 7
    %v218 = vsub.s32 2, %v217
    %v219 = vrot.slane %v206, %v218
    %v220 = vlaneseq
    %v221 = vshrl.u32 %v220, 7
    %v222 = vsub.s32 3, %v221
    %v223 = vrot.slane %v206, %v222
    %v228 = vld [vmem:[%s0] sm:$0xff]
    %229 = vmatprep.subr.mxu0 %v57
    %230 = vmatpush1.msra.mxu0 %v56
    %231 = vmatprep.subr.mxu0 %v61
    %232 = vmatpush1.msra.mxu0 %v60
    %233 = vmatprep.subr.mxu0 %v65
    %234 = vmatpush1.msra.mxu0 %v64
    %235 = vmatprep.subr.mxu0 %v69
    %236 = vmatpush1.msra.mxu0 %v68
    %237 = vmatprep.subr.mxu0 %v73
    %238 = vmatpush1.msra.mxu0 %v72
    %239 = vmatprep.subr.mxu0 %v77
    %240 = vmatpush1.msra.mxu0 %v76
    %241 = vmatprep.subr.mxu0 %v81
    %242 = vmatpush1.msra.mxu0 %v80
    %243 = vmatprep.subr.mxu0 %v85
    %244 = vmatpush1.msra.mxu0 %v84
    %245 = vmatprep.subr.mxu0 %v89
    %246 = vmatpush1.msra.mxu0 %v88
    %247 = vmatprep.subr.mxu0 %v93
    %248 = vmatpush1.msra.mxu0 %v92
    %249 = vmatprep.subr.mxu0 %v97
    %250 = vmatpush1.msra.mxu0 %v96
    %251 = vmatprep.subr.mxu0 %v101
    %252 = vmatpush1.msra.mxu0 %v100
    %253 = vmatprep.subr.mxu0 %v105
    %254 = vmatpush1.msra.mxu0 %v104
    %255 = vmatprep.subr.mxu0 %v109
    %256 = vmatpush1.msra.mxu0 %v108
    %257 = vmatprep.subr.mxu0 %v113
    %258 = vmatpush1.msra.mxu0 %v112
    %259 = vmatprep.subr.mxu0 %v117
    %260 = vmatpush1.msra.mxu0 %v116
    %261 = vmatprep.subr.mxu0 0.0
    %262 = vmatpush1.msra.mxu0 0.0
    %263 = vmatprep.subr.mxu0 0.0
    %264 = vmatpush1.msra.mxu0 0.0
    %265 = vmatprep.subr.mxu0 0.0
    %266 = vmatpush1.msra.mxu0 0.0
    %267 = vmatprep.subr.mxu0 0.0
    %268 = vmatpush1.msra.mxu0 0.0
    %269 = vmatprep.subr.mxu0 0.0
    %270 = vmatpush1.msra.mxu0 0.0
    %271 = vmatprep.subr.mxu0 0.0
    %272 = vmatpush1.msra.mxu0 0.0
    %273 = vmatprep.subr.mxu0 0.0
    %274 = vmatpush1.msra.mxu0 0.0
    %275 = vmatprep.subr.mxu0 0.0
    %276 = vmatpush1.msra.mxu0 0.0
    %277 = vmatprep.subr.mxu0 0.0
    %278 = vmatpush1.msra.mxu0 0.0
    %279 = vmatprep.subr.mxu0 0.0
    %280 = vmatpush1.msra.mxu0 0.0
    %281 = vmatprep.subr.mxu0 0.0
    %282 = vmatpush1.msra.mxu0 0.0
    %283 = vmatprep.subr.mxu0 0.0
    %284 = vmatpush1.msra.mxu0 0.0
    %285 = vmatprep.subr.mxu0 0.0
    %286 = vmatpush1.msra.mxu0 0.0
    %287 = vmatprep.subr.mxu0 0.0
    %288 = vmatpush1.msra.mxu0 0.0
    %289 = vmatprep.subr.mxu0 0.0
    %290 = vmatpush1.msra.mxu0 0.0
    %291 = vmatprep.subr.mxu0 0.0
    %292 = vmatpush1.msra.mxu0 0.0
    %293 = vmatprep.mubr.f32.mxu0 0.0
    %294 = vmatmul.mubr.f32.gmra.mrb[0].mxu0 %v228
    %v295 = vpop.f32.mrb[0].mxu0
    %v296 = vadd.f32 %v189, %v295
    %v297 = vpop.f32.mrb[0].mxu0
    %v298 = vadd.f32 %v193, %v297
    %299 = vdwg.mxu0
    %300 = vmatprep.subr.mxu0 %v59
    %301 = vmatpush1.msra.mxu0 %v58
    %302 = vmatprep.subr.mxu0 %v63
    %303 = vmatpush1.msra.mxu0 %v62
    %304 = vmatprep.subr.mxu0 %v67
    %305 = vmatpush1.msra.mxu0 %v66
    %306 = vmatprep.subr.mxu0 %v71
    %307 = vmatpush1.msra.mxu0 %v70
    %308 = vmatprep.subr.mxu0 %v75
    %309 = vmatpush1.msra.mxu0 %v74
    %310 = vmatprep.subr.mxu0 %v79
    %311 = vmatpush1.msra.mxu0 %v78
    %312 = vmatprep.subr.mxu0 %v83
    %313 = vmatpush1.msra.mxu0 %v82
    %314 = vmatprep.subr.mxu0 %v87
    %315 = vmatpush1.msra.mxu0 %v86
    %316 = vmatprep.subr.mxu0 %v91
    %317 = vmatpush1.msra.mxu0 %v90
    %318 = vmatprep.subr.mxu0 %v95
    %319 = vmatpush1.msra.mxu0 %v94
    %320 = vmatprep.subr.mxu0 %v99
    %321 = vmatpush1.msra.mxu0 %v98
    %322 = vmatprep.subr.mxu0 %v103
    %323 = vmatpush1.msra.mxu0 %v102
    %324 = vmatprep.subr.mxu0 %v107
    %325 = vmatpush1.msra.mxu0 %v106
    %326 = vmatprep.subr.mxu0 %v111
    %327 = vmatpush1.msra.mxu0 %v110
    %328 = vmatprep.subr.mxu0 %v115
    %329 = vmatpush1.msra.mxu0 %v114
    %330 = vmatprep.subr.mxu0 %v119
    %331 = vmatpush1.msra.mxu0 %v118
    %332 = vmatprep.subr.mxu0 0.0
    %333 = vmatpush1.msra.mxu0 0.0
    %334 = vmatprep.subr.mxu0 0.0
    %335 = vmatpush1.msra.mxu0 0.0
    %336 = vmatprep.subr.mxu0 0.0
    %337 = vmatpush1.msra.mxu0 0.0
    %338 = vmatprep.subr.mxu0 0.0
    %339 = vmatpush1.msra.mxu0 0.0
    %340 = vmatprep.subr.mxu0 0.0
    %341 = vmatpush1.msra.mxu0 0.0
    %342 = vmatprep.subr.mxu0 0.0
    %343 = vmatpush1.msra.mxu0 0.0
    %344 = vmatprep.subr.mxu0 0.0
    %345 = vmatpush1.msra.mxu0 0.0
    %346 = vmatprep.subr.mxu0 0.0
    %347 = vmatpush1.msra.mxu0 0.0
    %348 = vmatprep.subr.mxu0 0.0
    %349 = vmatpush1.msra.mxu0 0.0
    %350 = vmatprep.subr.mxu0 0.0
    %351 = vmatpush1.msra.mxu0 0.0
    %352 = vmatprep.subr.mxu0 0.0
    %353 = vmatpush1.msra.mxu0 0.0
    %354 = vmatprep.subr.mxu0 0.0
    %355 = vmatpush1.msra.mxu0 0.0
    %356 = vmatprep.subr.mxu0 0.0
    %357 = vmatpush1.msra.mxu0 0.0
    %358 = vmatprep.subr.mxu0 0.0
    %359 = vmatpush1.msra.mxu0 0.0
    %360 = vmatprep.subr.mxu0 0.0
    %361 = vmatpush1.msra.mxu0 0.0
    %362 = vmatprep.subr.mxu0 0.0
    %363 = vmatpush1.msra.mxu0 0.0
    %364 = vmatprep.mubr.f32.mxu0 0.0
    %365 = vmatmul.mubr.f32.gmra.mrb[0].mxu0 %v228
    %v366 = vpop.f32.mrb[0].mxu0
    %v367 = vadd.f32 %v197, %v366
    %v368 = vpop.f32.mrb[0].mxu0
    %v369 = vadd.f32 %v201, %v368
    %370 = vdwg.mxu0
    %v371 = vxor.u32 %v296, 2147483648
    %v372 = vmul.f32 %v371, 1.442695
    %v373 = vpow.pop %v372
    %v374 = vadd.f32 %v373, 1.0
    %v375 = vrcp.pop %v374
    %v376 = vmul.f32 1.0, %v375
    %v377 = vxor.u32 %v298, 2147483648
    %v378 = vmul.f32 %v377, 1.442695
    %v379 = vpow.pop %v378
    %v380 = vadd.f32 %v379, 1.0
    %v381 = vrcp.pop %v380
    %v382 = vmul.f32 1.0, %v381
    %v383 = vtanh.pop %v367
    %v384 = vxor.u32 %v369, 2147483648
    %v385 = vmul.f32 %v384, 1.442695
    %v386 = vpow.pop %v385
    %v387 = vadd.f32 %v386, 1.0
    %v388 = vrcp.pop %v387
    %v389 = vmul.f32 1.0, %v388
    %v390 = vmul.f32 %v382, 0.0
    %v391 = vmul.f32 %v376, %v383
    %v392 = vadd.f32 %v390, %v391
    %v393 = vtanh.pop %v392
    %v394 = vmul.f32 %v389, %v393
    %395 = vst [vmem:[#allocation2] sm:$0xff] %v394
    %396 = vmatprep.subr.mxu0 %v121
    %397 = vmatpush1.msra.mxu0 %v120
    %398 = vmatprep.subr.mxu0 %v125
    %399 = vmatpush1.msra.mxu0 %v124
    %400 = vmatprep.subr.mxu0 %v129
    %401 = vmatpush1.msra.mxu0 %v128
    %402 = vmatprep.subr.mxu0 %v133
    %403 = vmatpush1.msra.mxu0 %v132
    %404 = vmatprep.subr.mxu0 %v137
    %405 = vmatpush1.msra.mxu0 %v136
    %406 = vmatprep.subr.mxu0 %v141
    %407 = vmatpush1.msra.mxu0 %v140
    %408 = vmatprep.subr.mxu0 %v145
    %409 = vmatpush1.msra.mxu0 %v144
    %410 = vmatprep.subr.mxu0 %v149
    %411 = vmatpush1.msra.mxu0 %v148
    %412 = vmatprep.subr.mxu0 %v153
    %413 = vmatpush1.msra.mxu0 %v152
    %414 = vmatprep.subr.mxu0 %v157
    %415 = vmatpush1.msra.mxu0 %v156
    %416 = vmatprep.subr.mxu0 %v161
    %417 = vmatpush1.msra.mxu0 %v160
    %418 = vmatprep.subr.mxu0 %v165
    %419 = vmatpush1.msra.mxu0 %v164
    %420 = vmatprep.subr.mxu0 %v169
    %421 = vmatpush1.msra.mxu0 %v168
    %422 = vmatprep.subr.mxu0 %v173
    %423 = vmatpush1.msra.mxu0 %v172
    %424 = vmatprep.subr.mxu0 %v177
    %425 = vmatpush1.msra.mxu0 %v176
    %426 = vmatprep.subr.mxu0 %v181
    %427 = vmatpush1.msra.mxu0 %v180
    %428 = vmatprep.subr.mxu0 0.0
    %429 = vmatpush1.msra.mxu0 0.0
    %430 = vmatprep.subr.mxu0 0.0
    %431 = vmatpush1.msra.mxu0 0.0
    %432 = vmatprep.subr.mxu0 0.0
    %433 = vmatpush1.msra.mxu0 0.0
    %434 = vmatprep.subr.mxu0 0.0
    %435 = vmatpush1.msra.mxu0 0.0
    %436 = vmatprep.subr.mxu0 0.0
    %437 = vmatpush1.msra.mxu0 0.0
    %438 = vmatprep.subr.mxu0 0.0
    %439 = vmatpush1.msra.mxu0 0.0
    %440 = vmatprep.subr.mxu0 0.0
    %441 = vmatpush1.msra.mxu0 0.0
    %442 = vmatprep.subr.mxu0 0.0
    %443 = vmatpush1.msra.mxu0 0.0
    %444 = vmatprep.subr.mxu0 0.0
    %445 = vmatpush1.msra.mxu0 0.0
    %446 = vmatprep.subr.mxu0 0.0
    %447 = vmatpush1.msra.mxu0 0.0
    %448 = vmatprep.subr.mxu0 0.0
    %449 = vmatpush1.msra.mxu0 0.0
    %450 = vmatprep.subr.mxu0 0.0
    %451 = vmatpush1.msra.mxu0 0.0
    %452 = vmatprep.subr.mxu0 0.0
    %453 = vmatpush1.msra.mxu0 0.0
    %454 = vmatprep.subr.mxu0 0.0
    %455 = vmatpush1.msra.mxu0 0.0
    %456 = vmatprep.subr.mxu0 0.0
    %457 = vmatpush1.msra.mxu0 0.0
    %458 = vmatprep.subr.mxu0 0.0
    %459 = vmatpush1.msra.mxu0 0.0
    %460 = vmatprep.mubr.f32.mxu0 0.0
    %461 = vmatmul.mubr.f32.gmra.mrb[0].mxu0 %v394
    %v462 = vpop.f32.mrb[0].mxu0
    %v463 = vadd.f32 %v211, %v462
    %v464 = vpop.f32.mrb[0].mxu0
    %v465 = vadd.f32 %v215, %v464
    %466 = vdwg.mxu0
    %467 = vmatprep.subr.mxu0 %v123
    %468 = vmatpush1.msra.mxu0 %v122
    %469 = vmatprep.subr.mxu0 %v127
    %470 = vmatpush1.msra.mxu0 %v126
    %471 = vmatprep.subr.mxu0 %v131
    %472 = vmatpush1.msra.mxu0 %v130
    %473 = vmatprep.subr.mxu0 %v135
    %474 = vmatpush1.msra.mxu0 %v134
    %475 = vmatprep.subr.mxu0 %v139
    %476 = vmatpush1.msra.mxu0 %v138
    %477 = vmatprep.subr.mxu0 %v143
    %478 = vmatpush1.msra.mxu0 %v142
    %479 = vmatprep.subr.mxu0 %v147
    %480 = vmatpush1.msra.mxu0 %v146
    %481 = vmatprep.subr.mxu0 %v151
    %482 = vmatpush1.msra.mxu0 %v150
    %483 = vmatprep.subr.mxu0 %v155
    %484 = vmatpush1.msra.mxu0 %v154
    %485 = vmatprep.subr.mxu0 %v159
    %486 = vmatpush1.msra.mxu0 %v158
    %487 = vmatprep.subr.mxu0 %v163
    %488 = vmatpush1.msra.mxu0 %v162
    %489 = vmatprep.subr.mxu0 %v167
    %490 = vmatpush1.msra.mxu0 %v166
    %491 = vmatprep.subr.mxu0 %v171
    %492 = vmatpush1.msra.mxu0 %v170
    %493 = vmatprep.subr.mxu0 %v175
    %494 = vmatpush1.msra.mxu0 %v174
    %495 = vmatprep.subr.mxu0 %v179
    %496 = vmatpush1.msra.mxu0 %v178
    %497 = vmatprep.subr.mxu0 %v183
    %498 = vmatpush1.msra.mxu0 %v182
    %499 = vmatprep.subr.mxu0 0.0
    %500 = vmatpush1.msra.mxu0 0.0
    %501 = vmatprep.subr.mxu0 0.0
    %502 = vmatpush1.msra.mxu0 0.0
    %503 = vmatprep.subr.mxu0 0.0
    %504 = vmatpush1.msra.mxu0 0.0
    %505 = vmatprep.subr.mxu0 0.0
    %506 = vmatpush1.msra.mxu0 0.0
    %507 = vmatprep.subr.mxu0 0.0
    %508 = vmatpush1.msra.mxu0 0.0
    %509 = vmatprep.subr.mxu0 0.0
    %510 = vmatpush1.msra.mxu0 0.0
    %511 = vmatprep.subr.mxu0 0.0
    %512 = vmatpush1.msra.mxu0 0.0
    %513 = vmatprep.subr.mxu0 0.0
    %514 = vmatpush1.msra.mxu0 0.0
    %515 = vmatprep.subr.mxu0 0.0
    %516 = vmatpush1.msra.mxu0 0.0
    %517 = vmatprep.subr.mxu0 0.0
    %518 = vmatpush1.msra.mxu0 0.0
    %519 = vmatprep.subr.mxu0 0.0
    %520 = vmatpush1.msra.mxu0 0.0
    %521 = vmatprep.subr.mxu0 0.0
    %522 = vmatpush1.msra.mxu0 0.0
    %523 = vmatprep.subr.mxu0 0.0
    %524 = vmatpush1.msra.mxu0 0.0
    %525 = vmatprep.subr.mxu0 0.0
    %526 = vmatpush1.msra.mxu0 0.0
    %527 = vmatprep.subr.mxu0 0.0
    %528 = vmatpush1.msra.mxu0 0.0
    %529 = vmatprep.subr.mxu0 0.0
    %530 = vmatpush1.msra.mxu0 0.0
    %531 = vmatprep.mubr.f32.mxu0 0.0
    %532 = vmatmul.mubr.f32.gmra.mrb[0].mxu0 %v394
    %v533 = vpop.f32.mrb[0].mxu0
    %v534 = vadd.f32 %v219, %v533
    %v535 = vpop.f32.mrb[0].mxu0
    %v536 = vadd.f32 %v223, %v535
    %537 = vdwg.mxu0
    %v538 = vxor.u32 %v463, 2147483648
    %v539 = vmul.f32 %v538, 1.442695
    %v540 = vpow.pop %v539
    %v541 = vadd.f32 %v540, 1.0
    %v542 = vrcp.pop %v541
    %v543 = vmul.f32 1.0, %v542
    %v544 = vxor.u32 %v465, 2147483648
    %v545 = vmul.f32 %v544, 1.442695
    %v546 = vpow.pop %v545
    %v547 = vadd.f32 %v546, 1.0
    %v548 = vrcp.pop %v547
    %v549 = vmul.f32 1.0, %v548
    %v550 = vtanh.pop %v534
    %v551 = vxor.u32 %v536, 2147483648
    %v552 = vmul.f32 %v551, 1.442695
    %v553 = vpow.pop %v552
    %v554 = vadd.f32 %v553, 1.0
    %v555 = vrcp.pop %v554
    %v556 = vmul.f32 1.0, %v555
    %v557 = vmul.f32 %v549, %v392
    %v558 = vmul.f32 %v543, %v550
    %v559 = vadd.f32 %v557, %v558
    %v560 = vtanh.pop %v559
    %v561 = vmul.f32 %v556, %v560
    %562 = vst [vmem:[#allocation2 + $0x8] sm:$0xff] %v561
    %563 = vmatprep.subr.mxu0 %v121
    %564 = vmatpush1.msra.mxu0 %v120
    %565 = vmatprep.subr.mxu0 %v125
    %566 = vmatpush1.msra.mxu0 %v124
    %567 = vmatprep.subr.mxu0 %v129
    %568 = vmatpush1.msra.mxu0 %v128
    %569 = vmatprep.subr.mxu0 %v133
    %570 = vmatpush1.msra.mxu0 %v132
    %571 = vmatprep.subr.mxu0 %v137
    %572 = vmatpush1.msra.mxu0 %v136
    %573 = vmatprep.subr.mxu0 %v141
    %574 = vmatpush1.msra.mxu0 %v140
    %575 = vmatprep.subr.mxu0 %v145
    %576 = vmatpush1.msra.mxu0 %v144
    %577 = vmatprep.subr.mxu0 %v149
    %578 = vmatpush1.msra.mxu0 %v148
    %579 = vmatprep.subr.mxu0 %v153
    %580 = vmatpush1.msra.mxu0 %v152
    %581 = vmatprep.subr.mxu0 %v157
    %582 = vmatpush1.msra.mxu0 %v156
    %583 = vmatprep.subr.mxu0 %v161
    %584 = vmatpush1.msra.mxu0 %v160
    %585 = vmatprep.subr.mxu0 %v165
    %586 = vmatpush1.msra.mxu0 %v164
    %587 = vmatprep.subr.mxu0 %v169
    %588 = vmatpush1.msra.mxu0 %v168
    %589 = vmatprep.subr.mxu0 %v173
    %590 = vmatpush1.msra.mxu0 %v172
    %591 = vmatprep.subr.mxu0 %v177
    %592 = vmatpush1.msra.mxu0 %v176
    %593 = vmatprep.subr.mxu0 %v181
    %594 = vmatpush1.msra.mxu0 %v180
    %595 = vmatprep.subr.mxu0 0.0
    %596 = vmatpush1.msra.mxu0 0.0
    %597 = vmatprep.subr.mxu0 0.0
    %598 = vmatpush1.msra.mxu0 0.0
    %599 = vmatprep.subr.mxu0 0.0
    %600 = vmatpush1.msra.mxu0 0.0
    %601 = vmatprep.subr.mxu0 0.0
    %602 = vmatpush1.msra.mxu0 0.0
    %603 = vmatprep.subr.mxu0 0.0
    %604 = vmatpush1.msra.mxu0 0.0
    %605 = vmatprep.subr.mxu0 0.0
    %606 = vmatpush1.msra.mxu0 0.0
    %607 = vmatprep.subr.mxu0 0.0
    %608 = vmatpush1.msra.mxu0 0.0
    %609 = vmatprep.subr.mxu0 0.0
    %610 = vmatpush1.msra.mxu0 0.0
    %611 = vmatprep.subr.mxu0 0.0
    %612 = vmatpush1.msra.mxu0 0.0
    %613 = vmatprep.subr.mxu0 0.0
    %614 = vmatpush1.msra.mxu0 0.0
    %615 = vmatprep.subr.mxu0 0.0
    %616 = vmatpush1.msra.mxu0 0.0
    %617 = vmatprep.subr.mxu0 0.0
    %618 = vmatpush1.msra.mxu0 0.0
    %619 = vmatprep.subr.mxu0 0.0
    %620 = vmatpush1.msra.mxu0 0.0
    %621 = vmatprep.subr.mxu0 0.0
    %622 = vmatpush1.msra.mxu0 0.0
    %623 = vmatprep.subr.mxu0 0.0
    %624 = vmatpush1.msra.mxu0 0.0
    %625 = vmatprep.subr.mxu0 0.0
    %626 = vmatpush1.msra.mxu0 0.0
    %627 = vmatprep.mubr.f32.mxu0 0.0
    %628 = vmatmul.mubr.f32.gmra.mrb[0].mxu0 %v561
    %v629 = vpop.f32.mrb[0].mxu0
    %v630 = vadd.f32 %v211, %v629
    %v631 = vpop.f32.mrb[0].mxu0
    %v632 = vadd.f32 %v215, %v631
    %633 = vdwg.mxu0
    %634 = vmatprep.subr.mxu0 %v123
    %635 = vmatpush1.msra.mxu0 %v122
    %636 = vmatprep.subr.mxu0 %v127
    %637 = vmatpush1.msra.mxu0 %v126
    %638 = vmatprep.subr.mxu0 %v131
    %639 = vmatpush1.msra.mxu0 %v130
    %640 = vmatprep.subr.mxu0 %v135
    %641 = vmatpush1.msra.mxu0 %v134
    %642 = vmatprep.subr.mxu0 %v139
    %643 = vmatpush1.msra.mxu0 %v138
    %644 = vmatprep.subr.mxu0 %v143
    %645 = vmatpush1.msra.mxu0 %v142
    %646 = vmatprep.subr.mxu0 %v147
    %647 = vmatpush1.msra.mxu0 %v146
    %648 = vmatprep.subr.mxu0 %v151
    %649 = vmatpush1.msra.mxu0 %v150
    %650 = vmatprep.subr.mxu0 %v155
    %651 = vmatpush1.msra.mxu0 %v154
    %652 = vmatprep.subr.mxu0 %v159
    %653 = vmatpush1.msra.mxu0 %v158
    %654 = vmatprep.subr.mxu0 %v163
    %655 = vmatpush1.msra.mxu0 %v162
    %656 = vmatprep.subr.mxu0 %v167
    %657 = vmatpush1.msra.mxu0 %v166
    %658 = vmatprep.subr.mxu0 %v171
    %659 = vmatpush1.msra.mxu0 %v170
    %660 = vmatprep.subr.mxu0 %v175
    %661 = vmatpush1.msra.mxu0 %v174
    %662 = vmatprep.subr.mxu0 %v179
    %663 = vmatpush1.msra.mxu0 %v178
    %664 = vmatprep.subr.mxu0 %v183
    %665 = vmatpush1.msra.mxu0 %v182
    %666 = vmatprep.subr.mxu0 0.0
    %667 = vmatpush1.msra.mxu0 0.0
    %668 = vmatprep.subr.mxu0 0.0
    %669 = vmatpush1.msra.mxu0 0.0
    %670 = vmatprep.subr.mxu0 0.0
    %671 = vmatpush1.msra.mxu0 0.0
    %672 = vmatprep.subr.mxu0 0.0
    %673 = vmatpush1.msra.mxu0 0.0
    %674 = vmatprep.subr.mxu0 0.0
    %675 = vmatpush1.msra.mxu0 0.0
    %676 = vmatprep.subr.mxu0 0.0
    %677 = vmatpush1.msra.mxu0 0.0
    %678 = vmatprep.subr.mxu0 0.0
    %679 = vmatpush1.msra.mxu0 0.0
    %680 = vmatprep.subr.mxu0 0.0
    %681 = vmatpush1.msra.mxu0 0.0
    %682 = vmatprep.subr.mxu0 0.0
    %683 = vmatpush1.msra.mxu0 0.0
    %684 = vmatprep.subr.mxu0 0.0
    %685 = vmatpush1.msra.mxu0 0.0
    %686 = vmatprep.subr.mxu0 0.0
    %687 = vmatpush1.msra.mxu0 0.0
    %688 = vmatprep.subr.mxu0 0.0
    %689 = vmatpush1.msra.mxu0 0.0
    %690 = vmatprep.subr.mxu0 0.0
    %691 = vmatpush1.msra.mxu0 0.0
    %692 = vmatprep.subr.mxu0 0.0
    %693 = vmatpush1.msra.mxu0 0.0
    %694 = vmatprep.subr.mxu0 0.0
    %695 = vmatpush1.msra.mxu0 0.0
    %696 = vmatprep.subr.mxu0 0.0
    %697 = vmatpush1.msra.mxu0 0.0
    %698 = vmatprep.mubr.f32.mxu0 0.0
    %699 = vmatmul.mubr.f32.gmra.mrb[0].mxu0 %v561
    %v700 = vpop.f32.mrb[0].mxu0
    %v701 = vadd.f32 %v219, %v700
    %v702 = vpop.f32.mrb[0].mxu0
    %v703 = vadd.f32 %v223, %v702
    %704 = vdwg.mxu0
    %v705 = vxor.u32 %v630, 2147483648
    %v706 = vmul.f32 %v705, 1.442695
    %v707 = vpow.pop %v706
    %v708 = vadd.f32 %v707, 1.0
    %v709 = vrcp.pop %v708
    %v710 = vmul.f32 1.0, %v709
    %v711 = vxor.u32 %v632, 2147483648
    %v712 = vmul.f32 %v711, 1.442695
    %v713 = vpow.pop %v712
    %v714 = vadd.f32 %v713, 1.0
    %v715 = vrcp.pop %v714
    %v716 = vmul.f32 1.0, %v715
    %v717 = vtanh.pop %v701
    %v718 = vxor.u32 %v703, 2147483648
    %v719 = vmul.f32 %v718, 1.442695
    %v720 = vpow.pop %v719
    %v721 = vadd.f32 %v720, 1.0
    %v722 = vrcp.pop %v721
    %v723 = vmul.f32 1.0, %v722
    %v724 = vmul.f32 %v716, %v559
    %v725 = vmul.f32 %v710, %v717
    %v726 = vadd.f32 %v724, %v725
    %v727 = vtanh.pop %v726
    %v728 = vmul.f32 %v723, %v727
    %729 = vst [vmem:[#allocation2 + $0x10] sm:$0xff] %v728
    %730 = vmatprep.subr.mxu0 %v121
    %731 = vmatpush1.msra.mxu0 %v120
    %732 = vmatprep.subr.mxu0 %v125
    %733 = vmatpush1.msra.mxu0 %v124
    %734 = vmatprep.subr.mxu0 %v129
    %735 = vmatpush1.msra.mxu0 %v128
    %736 = vmatprep.subr.mxu0 %v133
    %737 = vmatpush1.msra.mxu0 %v132
    %738 = vmatprep.subr.mxu0 %v137
    %739 = vmatpush1.msra.mxu0 %v136
    %740 = vmatprep.subr.mxu0 %v141
    %741 = vmatpush1.msra.mxu0 %v140
    %742 = vmatprep.subr.mxu0 %v145
    %743 = vmatpush1.msra.mxu0 %v144
    %744 = vmatprep.subr.mxu0 %v149
    %745 = vmatpush1.msra.mxu0 %v148
    %746 = vmatprep.subr.mxu0 %v153
    %747 = vmatpush1.msra.mxu0 %v152
    %748 = vmatprep.subr.mxu0 %v157
    %749 = vmatpush1.msra.mxu0 %v156
    %750 = vmatprep.subr.mxu0 %v161
    %751 = vmatpush1.msra.mxu0 %v160
    %752 = vmatprep.subr.mxu0 %v165
    %753 = vmatpush1.msra.mxu0 %v164
    %754 = vmatprep.subr.mxu0 %v169
    %755 = vmatpush1.msra.mxu0 %v168
    %756 = vmatprep.subr.mxu0 %v173
    %757 = vmatpush1.msra.mxu0 %v172
    %758 = vmatprep.subr.mxu0 %v177
    %759 = vmatpush1.msra.mxu0 %v176
    %760 = vmatprep.subr.mxu0 %v181
    %761 = vmatpush1.msra.mxu0 %v180
    %762 = vmatprep.subr.mxu0 0.0
    %763 = vmatpush1.msra.mxu0 0.0
    %764 = vmatprep.subr.mxu0 0.0
    %765 = vmatpush1.msra.mxu0 0.0
    %766 = vmatprep.subr.mxu0 0.0
    %767 = vmatpush1.msra.mxu0 0.0
    %768 = vmatprep.subr.mxu0 0.0
    %769 = vmatpush1.msra.mxu0 0.0
    %770 = vmatprep.subr.mxu0 0.0
    %771 = vmatpush1.msra.mxu0 0.0
    %772 = vmatprep.subr.mxu0 0.0
    %773 = vmatpush1.msra.mxu0 0.0
    %774 = vmatprep.subr.mxu0 0.0
    %775 = vmatpush1.msra.mxu0 0.0
    %776 = vmatprep.subr.mxu0 0.0
    %777 = vmatpush1.msra.mxu0 0.0
    %778 = vmatprep.subr.mxu0 0.0
    %779 = vmatpush1.msra.mxu0 0.0
    %780 = vmatprep.subr.mxu0 0.0
    %781 = vmatpush1.msra.mxu0 0.0
    %782 = vmatprep.subr.mxu0 0.0
    %783 = vmatpush1.msra.mxu0 0.0
    %784 = vmatprep.subr.mxu0 0.0
    %785 = vmatpush1.msra.mxu0 0.0
    %786 = vmatprep.subr.mxu0 0.0
    %787 = vmatpush1.msra.mxu0 0.0
    %788 = vmatprep.subr.mxu0 0.0
    %789 = vmatpush1.msra.mxu0 0.0
    %790 = vmatprep.subr.mxu0 0.0
    %791 = vmatpush1.msra.mxu0 0.0
    %792 = vmatprep.subr.mxu0 0.0
    %793 = vmatpush1.msra.mxu0 0.0
    %794 = vmatprep.mubr.f32.mxu0 0.0
    %795 = vmatmul.mubr.f32.gmra.mrb[0].mxu0 %v728
    %v796 = vpop.f32.mrb[0].mxu0
    %v797 = vadd.f32 %v211, %v796
    %v798 = vpop.f32.mrb[0].mxu0
    %v799 = vadd.f32 %v215, %v798
    %800 = vdwg.mxu0
    %801 = vmatprep.subr.mxu0 %v123
    %802 = vmatpush1.msra.mxu0 %v122
    %803 = vmatprep.subr.mxu0 %v127
    %804 = vmatpush1.msra.mxu0 %v126
    %805 = vmatprep.subr.mxu0 %v131
    %806 = vmatpush1.msra.mxu0 %v130
    %807 = vmatprep.subr.mxu0 %v135
    %808 = vmatpush1.msra.mxu0 %v134
    %809 = vmatprep.subr.mxu0 %v139
    %810 = vmatpush1.msra.mxu0 %v138
    %811 = vmatprep.subr.mxu0 %v143
    %812 = vmatpush1.msra.mxu0 %v142
    %813 = vmatprep.subr.mxu0 %v147
    %814 = vmatpush1.msra.mxu0 %v146
    %815 = vmatprep.subr.mxu0 %v151
    %816 = vmatpush1.msra.mxu0 %v150
    %817 = vmatprep.subr.mxu0 %v155
    %818 = vmatpush1.msra.mxu0 %v154
    %819 = vmatprep.subr.mxu0 %v159
    %820 = vmatpush1.msra.mxu0 %v158
    %821 = vmatprep.subr.mxu0 %v163
    %822 = vmatpush1.msra.mxu0 %v162
    %823 = vmatprep.subr.mxu0 %v167
    %824 = vmatpush1.msra.mxu0 %v166
    %825 = vmatprep.subr.mxu0 %v171
    %826 = vmatpush1.msra.mxu0 %v170
    %827 = vmatprep.subr.mxu0 %v175
    %828 = vmatpush1.msra.mxu0 %v174
    %829 = vmatprep.subr.mxu0 %v179
    %830 = vmatpush1.msra.mxu0 %v178
    %831 = vmatprep.subr.mxu0 %v183
    %832 = vmatpush1.msra.mxu0 %v182
    %833 = vmatprep.subr.mxu0 0.0
    %834 = vmatpush1.msra.mxu0 0.0
    %835 = vmatprep.subr.mxu0 0.0
    %836 = vmatpush1.msra.mxu0 0.0
    %837 = vmatprep.subr.mxu0 0.0
    %838 = vmatpush1.msra.mxu0 0.0
    %839 = vmatprep.subr.mxu0 0.0
    %840 = vmatpush1.msra.mxu0 0.0
    %841 = vmatprep.subr.mxu0 0.0
    %842 = vmatpush1.msra.mxu0 0.0
    %843 = vmatprep.subr.mxu0 0.0
    %844 = vmatpush1.msra.mxu0 0.0
    %845 = vmatprep.subr.mxu0 0.0
    %846 = vmatpush1.msra.mxu0 0.0
    %847 = vmatprep.subr.mxu0 0.0
    %848 = vmatpush1.msra.mxu0 0.0
    %849 = vmatprep.subr.mxu0 0.0
    %850 = vmatpush1.msra.mxu0 0.0
    %851 = vmatprep.subr.mxu0 0.0
    %852 = vmatpush1.msra.mxu0 0.0
    %853 = vmatprep.subr.mxu0 0.0
    %854 = vmatpush1.msra.mxu0 0.0
    %855 = vmatprep.subr.mxu0 0.0
    %856 = vmatpush1.msra.mxu0 0.0
    %857 = vmatprep.subr.mxu0 0.0
    %858 = vmatpush1.msra.mxu0 0.0
    %859 = vmatprep.subr.mxu0 0.0
    %860 = vmatpush1.msra.mxu0 0.0
    %861 = vmatprep.subr.mxu0 0.0
    %862 = vmatpush1.msra.mxu0 0.0
    %863 = vmatprep.subr.mxu0 0.0
    %864 = vmatpush1.msra.mxu0 0.0
    %865 = vmatprep.mubr.f32.mxu0 0.0
    %866 = vmatmul.mubr.f32.gmra.mrb[0].mxu0 %v728
    %v867 = vpop.f32.mrb[0].mxu0
    %v868 = vadd.f32 %v219, %v867
    %v869 = vpop.f32.mrb[0].mxu0
    %v870 = vadd.f32 %v223, %v869
    %871 = vdwg.mxu0
    %v872 = vxor.u32 %v797, 2147483648
    %v873 = vmul.f32 %v872, 1.442695
    %v874 = vpow.pop %v873
    %v875 = vadd.f32 %v874, 1.0
    %v876 = vrcp.pop %v875
    %v877 = vmul.f32 1.0, %v876
    %v878 = vxor.u32 %v799, 2147483648
    %v879 = vmul.f32 %v878, 1.442695
    %v880 = vpow.pop %v879
    %v881 = vadd.f32 %v880, 1.0
    %v882 = vrcp.pop %v881
    %v883 = vmul.f32 1.0, %v882
    %v884 = vtanh.pop %v868
    %v885 = vxor.u32 %v870, 2147483648
    %v886 = vmul.f32 %v885, 1.442695
    %v887 = vpow.pop %v886
    %v888 = vadd.f32 %v887, 1.0
    %v889 = vrcp.pop %v888
    %v890 = vmul.f32 1.0, %v889
    %v891 = vmul.f32 %v883, %v726
    %v892 = vmul.f32 %v877, %v884
    %v893 = vadd.f32 %v891, %v892
    %v894 = vtanh.pop %v893
    %v895 = vmul.f32 %v890, %v894
    %896 = vst [vmem:[#allocation2 + $0x18] sm:$0xff] %v895
    %897 = vmatprep.subr.mxu0 %v121
    %898 = vmatpush1.msra.mxu0 %v120
    %899 = vmatprep.subr.mxu0 %v125
    %900 = vmatpush1.msra.mxu0 %v124
    %901 = vmatprep.subr.mxu0 %v129
    %902 = vmatpush1.msra.mxu0 %v128
    %903 = vmatprep.subr.mxu0 %v133
    %904 = vmatpush1.msra.mxu0 %v132
    %905 = vmatprep.subr.mxu0 %v137
    %906 = vmatpush1.msra.mxu0 %v136
    %907 = vmatprep.subr.mxu0 %v141
    %908 = vmatpush1.msra.mxu0 %v140
    %909 = vmatprep.subr.mxu0 %v145
    %910 = vmatpush1.msra.mxu0 %v144
    %911 = vmatprep.subr.mxu0 %v149
    %912 = vmatpush1.msra.mxu0 %v148
    %913 = vmatprep.subr.mxu0 %v153
    %914 = vmatpush1.msra.mxu0 %v152
    %915 = vmatprep.subr.mxu0 %v157
    %916 = vmatpush1.msra.mxu0 %v156
    %917 = vmatprep.subr.mxu0 %v161
    %918 = vmatpush1.msra.mxu0 %v160
    %919 = vmatprep.subr.mxu0 %v165
    %920 = vmatpush1.msra.mxu0 %v164
    %921 = vmatprep.subr.mxu0 %v169
    %922 = vmatpush1.msra.mxu0 %v168
    %923 = vmatprep.subr.mxu0 %v173
    %924 = vmatpush1.msra.mxu0 %v172
    %925 = vmatprep.subr.mxu0 %v177
    %926 = vmatpush1.msra.mxu0 %v176
    %927 = vmatprep.subr.mxu0 %v181
    %928 = vmatpush1.msra.mxu0 %v180
    %929 = vmatprep.subr.mxu0 0.0
    %930 = vmatpush1.msra.mxu0 0.0
    %931 = vmatprep.subr.mxu0 0.0
    %932 = vmatpush1.msra.mxu0 0.0
    %933 = vmatprep.subr.mxu0 0.0
    %934 = vmatpush1.msra.mxu0 0.0
    %935 = vmatprep.subr.mxu0 0.0
    %936 = vmatpush1.msra.mxu0 0.0
    %937 = vmatprep.subr.mxu0 0.0
    %938 = vmatpush1.msra.mxu0 0.0
    %939 = vmatprep.subr.mxu0 0.0
    %940 = vmatpush1.msra.mxu0 0.0
    %941 = vmatprep.subr.mxu0 0.0
    %942 = vmatpush1.msra.mxu0 0.0
    %943 = vmatprep.subr.mxu0 0.0
    %944 = vmatpush1.msra.mxu0 0.0
    %945 = vmatprep.subr.mxu0 0.0
    %946 = vmatpush1.msra.mxu0 0.0
    %947 = vmatprep.subr.mxu0 0.0
    %948 = vmatpush1.msra.mxu0 0.0
    %949 = vmatprep.subr.mxu0 0.0
    %950 = vmatpush1.msra.mxu0 0.0
    %951 = vmatprep.subr.mxu0 0.0
    %952 = vmatpush1.msra.mxu0 0.0
    %953 = vmatprep.subr.mxu0 0.0
    %954 = vmatpush1.msra.mxu0 0.0
    %955 = vmatprep.subr.mxu0 0.0
    %956 = vmatpush1.msra.mxu0 0.0
    %957 = vmatprep.subr.mxu0 0.0
    %958 = vmatpush1.msra.mxu0 0.0
    %959 = vmatprep.subr.mxu0 0.0
    %960 = vmatpush1.msra.mxu0 0.0
    %961 = vmatprep.mubr.f32.mxu0 0.0
    %962 = vmatmul.mubr.f32.gmra.mrb[0].mxu0 %v895
    %v963 = vpop.f32.mrb[0].mxu0
    %v964 = vadd.f32 %v211, %v963
    %v965 = vpop.f32.mrb[0].mxu0
    %v966 = vadd.f32 %v215, %v965
    %967 = vdwg.mxu0
    %968 = vmatprep.subr.mxu0 %v123
    %969 = vmatpush1.msra.mxu0 %v122
    %970 = vmatprep.subr.mxu0 %v127
    %971 = vmatpush1.msra.mxu0 %v126
    %972 = vmatprep.subr.mxu0 %v131
    %973 = vmatpush1.msra.mxu0 %v130
    %974 = vmatprep.subr.mxu0 %v135
    %975 = vmatpush1.msra.mxu0 %v134
    %976 = vmatprep.subr.mxu0 %v139
    %977 = vmatpush1.msra.mxu0 %v138
    %978 = vmatprep.subr.mxu0 %v143
    %979 = vmatpush1.msra.mxu0 %v142
    %980 = vmatprep.subr.mxu0 %v147
    %981 = vmatpush1.msra.mxu0 %v146
    %982 = vmatprep.subr.mxu0 %v151
    %983 = vmatpush1.msra.mxu0 %v150
    %984 = vmatprep.subr.mxu0 %v155
    %985 = vmatpush1.msra.mxu0 %v154
    %986 = vmatprep.subr.mxu0 %v159
    %987 = vmatpush1.msra.mxu0 %v158
    %988 = vmatprep.subr.mxu0 %v163
    %989 = vmatpush1.msra.mxu0 %v162
    %990 = vmatprep.subr.mxu0 %v167
    %991 = vmatpush1.msra.mxu0 %v166
    %992 = vmatprep.subr.mxu0 %v171
    %993 = vmatpush1.msra.mxu0 %v170
    %994 = vmatprep.subr.mxu0 %v175
    %995 = vmatpush1.msra.mxu0 %v174
    %996 = vmatprep.subr.mxu0 %v179
    %997 = vmatpush1.msra.mxu0 %v178
    %998 = vmatprep.subr.mxu0 %v183
    %999 = vmatpush1.msra.mxu0 %v182
    %1000 = vmatprep.subr.mxu0 0.0
    %1001 = vmatpush1.msra.mxu0 0.0
    %1002 = vmatprep.subr.mxu0 0.0
    %1003 = vmatpush1.msra.mxu0 0.0
    %1004 = vmatprep.subr.mxu0 0.0
    %1005 = vmatpush1.msra.mxu0 0.0
    %1006 = vmatprep.subr.mxu0 0.0
    %1007 = vmatpush1.msra.mxu0 0.0
    %1008 = vmatprep.subr.mxu0 0.0
    %1009 = vmatpush1.msra.mxu0 0.0
    %1010 = vmatprep.subr.mxu0 0.0
    %1011 = vmatpush1.msra.mxu0 0.0
    %1012 = vmatprep.subr.mxu0 0.0
    %1013 = vmatpush1.msra.mxu0 0.0
    %1014 = vmatprep.subr.mxu0 0.0
    %1015 = vmatpush1.msra.mxu0 0.0
    %1016 = vmatprep.subr.mxu0 0.0
    %1017 = vmatpush1.msra.mxu0 0.0
    %1018 = vmatprep.subr.mxu0 0.0
    %1019 = vmatpush1.msra.mxu0 0.0
    %1020 = vmatprep.subr.mxu0 0.0
    %1021 = vmatpush1.msra.mxu0 0.0
    %1022 = vmatprep.subr.mxu0 0.0
    %1023 = vmatpush1.msra.mxu0 0.0
    %1024 = vmatprep.subr.mxu0 0.0
    %1025 = vmatpush1.msra.mxu0 0.0
    %1026 = vmatprep.subr.mxu0 0.0
    %1027 = vmatpush1.msra.mxu0 0.0
    %1028 = vmatprep.subr.mxu0 0.0
    %1029 = vmatpush1.msra.mxu0 0.0
    %1030 = vmatprep.subr.mxu0 0.0
    %1031 = vmatpush1.msra.mxu0 0.0
    %1032 = vmatprep.mubr.f32.mxu0 0.0
    %1033 = vmatmul.mubr.f32.gmra.mrb[0].mxu0 %v895
    %v1034 = vpop.f32.mrb[0].mxu0
    %v1035 = vadd.f32 %v219, %v1034
    %v1036 = vpop.f32.mrb[0].mxu0
    %v1037 = vadd.f32 %v223, %v1036
    %1038 = vdwg.mxu0
    %v1039 = vxor.u32 %v964, 2147483648
    %v1040 = vmul.f32 %v1039, 1.442695
    %v1041 = vpow.pop %v1040
    %v1042 = vadd.f32 %v1041, 1.0
    %v1043 = vrcp.pop %v1042
    %v1044 = vmul.f32 1.0, %v1043
    %v1045 = vxor.u32 %v966, 2147483648
    %v1046 = vmul.f32 %v1045, 1.442695
    %v1047 = vpow.pop %v1046
    %v1048 = vadd.f32 %v1047, 1.0
    %v1049 = vrcp.pop %v1048
    %v1050 = vmul.f32 1.0, %v1049
    %v1051 = vtanh.pop %v1035
    %v1052 = vxor.u32 %v1037, 2147483648
    %v1053 = vmul.f32 %v1052, 1.442695
    %v1054 = vpow.pop %v1053
    %v1055 = vadd.f32 %v1054, 1.0
    %v1056 = vrcp.pop %v1055
    %v1057 = vmul.f32 1.0, %v1056
    %v1058 = vmul.f32 %v1050, %v893
    %v1059 = vmul.f32 %v1044, %v1051
    %v1060 = vadd.f32 %v1058, %v1059
    %v1061 = vtanh.pop %v1060
    %v1062 = vmul.f32 %v1057, %v1061
    %1063 = vst [vmem:[#allocation2 + $0x20] sm:$0xff] %v1062
    %1064 = vmatprep.subr.mxu0 %v121
    %1065 = vmatpush1.msra.mxu0 %v120
    %1066 = vmatprep.subr.mxu0 %v125
    %1067 = vmatpush1.msra.mxu0 %v124
    %1068 = vmatprep.subr.mxu0 %v129
    %1069 = vmatpush1.msra.mxu0 %v128
    %1070 = vmatprep.subr.mxu0 %v133
    %1071 = vmatpush1.msra.mxu0 %v132
    %1072 = vmatprep.subr.mxu0 %v137
    %1073 = vmatpush1.msra.mxu0 %v136
    %1074 = vmatprep.subr.mxu0 %v141
    %1075 = vmatpush1.msra.mxu0 %v140
    %1076 = vmatprep.subr.mxu0 %v145
    %1077 = vmatpush1.msra.mxu0 %v144
    %1078 = vmatprep.subr.mxu0 %v149
    %1079 = vmatpush1.msra.mxu0 %v148
    %1080 = vmatprep.subr.mxu0 %v153
    %1081 = vmatpush1.msra.mxu0 %v152
    %1082 = vmatprep.subr.mxu0 %v157
    %1083 = vmatpush1.msra.mxu0 %v156
    %1084 = vmatprep.subr.mxu0 %v161
    %1085 = vmatpush1.msra.mxu0 %v160
    %1086 = vmatprep.subr.mxu0 %v165
    %1087 = vmatpush1.msra.mxu0 %v164
    %1088 = vmatprep.subr.mxu0 %v169
    %1089 = vmatpush1.msra.mxu0 %v168
    %1090 = vmatprep.subr.mxu0 %v173
    %1091 = vmatpush1.msra.mxu0 %v172
    %1092 = vmatprep.subr.mxu0 %v177
    %1093 = vmatpush1.msra.mxu0 %v176
    %1094 = vmatprep.subr.mxu0 %v181
    %1095 = vmatpush1.msra.mxu0 %v180
    %1096 = vmatprep.subr.mxu0 0.0
    %1097 = vmatpush1.msra.mxu0 0.0
    %1098 = vmatprep.subr.mxu0 0.0
    %1099 = vmatpush1.msra.mxu0 0.0
    %1100 = vmatprep.subr.mxu0 0.0
    %1101 = vmatpush1.msra.mxu0 0.0
    %1102 = vmatprep.subr.mxu0 0.0
    %1103 = vmatpush1.msra.mxu0 0.0
    %1104 = vmatprep.subr.mxu0 0.0
    %1105 = vmatpush1.msra.mxu0 0.0
    %1106 = vmatprep.subr.mxu0 0.0
    %1107 = vmatpush1.msra.mxu0 0.0
    %1108 = vmatprep.subr.mxu0 0.0
    %1109 = vmatpush1.msra.mxu0 0.0
    %1110 = vmatprep.subr.mxu0 0.0
    %1111 = vmatpush1.msra.mxu0 0.0
    %1112 = vmatprep.subr.mxu0 0.0
    %1113 = vmatpush1.msra.mxu0 0.0
    %1114 = vmatprep.subr.mxu0 0.0
    %1115 = vmatpush1.msra.mxu0 0.0
    %1116 = vmatprep.subr.mxu0 0.0
    %1117 = vmatpush1.msra.mxu0 0.0
    %1118 = vmatprep.subr.mxu0 0.0
    %1119 = vmatpush1.msra.mxu0 0.0
    %1120 = vmatprep.subr.mxu0 0.0
    %1121 = vmatpush1.msra.mxu0 0.0
    %1122 = vmatprep.subr.mxu0 0.0
    %1123 = vmatpush1.msra.mxu0 0.0
    %1124 = vmatprep.subr.mxu0 0.0
    %1125 = vmatpush1.msra.mxu0 0.0
    %1126 = vmatprep.subr.mxu0 0.0
    %1127 = vmatpush1.msra.mxu0 0.0
    %1128 = vmatprep.mubr.f32.mxu0 0.0
    %1129 = vmatmul.mubr.f32.gmra.mrb[0].mxu0 %v1062
    %v1130 = vpop.f32.mrb[0].mxu0
    %v1131 = vadd.f32 %v211, %v1130
    %v1132 = vpop.f32.mrb[0].mxu0
    %v1133 = vadd.f32 %v215, %v1132
    %1134 = vdwg.mxu0
    %1135 = vmatprep.subr.mxu0 %v123
    %1136 = vmatpush1.msra.mxu0 %v122
    %1137 = vmatprep.subr.mxu0 %v127
    %1138 = vmatpush1.msra.mxu0 %v126
    %1139 = vmatprep.subr.mxu0 %v131
    %1140 = vmatpush1.msra.mxu0 %v130
    %1141 = vmatprep.subr.mxu0 %v135
    %1142 = vmatpush1.msra.mxu0 %v134
    %1143 = vmatprep.subr.mxu0 %v139
    %1144 = vmatpush1.msra.mxu0 %v138
    %1145 = vmatprep.subr.mxu0 %v143
    %1146 = vmatpush1.msra.mxu0 %v142
    %1147 = vmatprep.subr.mxu0 %v147
    %1148 = vmatpush1.msra.mxu0 %v146
    %1149 = vmatprep.subr.mxu0 %v151
    %1150 = vmatpush1.msra.mxu0 %v150
    %1151 = vmatprep.subr.mxu0 %v155
    %1152 = vmatpush1.msra.mxu0 %v154
    %1153 = vmatprep.subr.mxu0 %v159
    %1154 = vmatpush1.msra.mxu0 %v158
    %1155 = vmatprep.subr.mxu0 %v163
    %1156 = vmatpush1.msra.mxu0 %v162
    %1157 = vmatprep.subr.mxu0 %v167
    %1158 = vmatpush1.msra.mxu0 %v166
    %1159 = vmatprep.subr.mxu0 %v171
    %1160 = vmatpush1.msra.mxu0 %v170
    %1161 = vmatprep.subr.mxu0 %v175
    %1162 = vmatpush1.msra.mxu0 %v174
    %1163 = vmatprep.subr.mxu0 %v179
    %1164 = vmatpush1.msra.mxu0 %v178
    %1165 = vmatprep.subr.mxu0 %v183
    %1166 = vmatpush1.msra.mxu0 %v182
    %1167 = vmatprep.subr.mxu0 0.0
    %1168 = vmatpush1.msra.mxu0 0.0
    %1169 = vmatprep.subr.mxu0 0.0
    %1170 = vmatpush1.msra.mxu0 0.0
    %1171 = vmatprep.subr.mxu0 0.0
    %1172 = vmatpush1.msra.mxu0 0.0
    %1173 = vmatprep.subr.mxu0 0.0
    %1174 = vmatpush1.msra.mxu0 0.0
    %1175 = vmatprep.subr.mxu0 0.0
    %1176 = vmatpush1.msra.mxu0 0.0
    %1177 = vmatprep.subr.mxu0 0.0
    %1178 = vmatpush1.msra.mxu0 0.0
    %1179 = vmatprep.subr.mxu0 0.0
    %1180 = vmatpush1.msra.mxu0 0.0
    %1181 = vmatprep.subr.mxu0 0.0
    %1182 = vmatpush1.msra.mxu0 0.0
    %1183 = vmatprep.subr.mxu0 0.0
    %1184 = vmatpush1.msra.mxu0 0.0
    %1185 = vmatprep.subr.mxu0 0.0
    %1186 = vmatpush1.msra.mxu0 0.0
    %1187 = vmatprep.subr.mxu0 0.0
    %1188 = vmatpush1.msra.mxu0 0.0
    %1189 = vmatprep.subr.mxu0 0.0
    %1190 = vmatpush1.msra.mxu0 0.0
    %1191 = vmatprep.subr.mxu0 0.0
    %1192 = vmatpush1.msra.mxu0 0.0
    %1193 = vmatprep.subr.mxu0 0.0
    %1194 = vmatpush1.msra.mxu0 0.0
    %1195 = vmatprep.subr.mxu0 0.0
    %1196 = vmatpush1.msra.mxu0 0.0
    %1197 = vmatprep.subr.mxu0 0.0
    %1198 = vmatpush1.msra.mxu0 0.0
    %1199 = vmatprep.mubr.f32.mxu0 0.0
    %1200 = vmatmul.mubr.f32.gmra.mrb[0].mxu0 %v1062
    %v1201 = vpop.f32.mrb[0].mxu0
    %v1202 = vadd.f32 %v219, %v1201
    %v1203 = vpop.f32.mrb[0].mxu0
    %v1204 = vadd.f32 %v223, %v1203
    %1205 = vdwg.mxu0
    %v1206 = vxor.u32 %v1131, 2147483648
    %v1207 = vmul.f32 %v1206, 1.442695
    %v1208 = vpow.pop %v1207
    %v1209 = vadd.f32 %v1208, 1.0
    %v1210 = vrcp.pop %v1209
    %v1211 = vmul.f32 1.0, %v1210
    %v1212 = vxor.u32 %v1133, 2147483648
    %v1213 = vmul.f32 %v1212, 1.442695
    %v1214 = vpow.pop %v1213
    %v1215 = vadd.f32 %v1214, 1.0
    %v1216 = vrcp.pop %v1215
    %v1217 = vmul.f32 1.0, %v1216
    %v1218 = vtanh.pop %v1202
    %v1219 = vxor.u32 %v1204, 2147483648
    %v1220 = vmul.f32 %v1219, 1.442695
    %v1221 = vpow.pop %v1220
    %v1222 = vadd.f32 %v1221, 1.0
    %v1223 = vrcp.pop %v1222
    %v1224 = vmul.f32 1.0, %v1223
    %v1225 = vmul.f32 %v1217, %v1060
    %v1226 = vmul.f32 %v1211, %v1218
    %v1227 = vadd.f32 %v1225, %v1226
    %v1228 = vtanh.pop %v1227
    %v1229 = vmul.f32 %v1224, %v1228
    %1230 = vst [vmem:[#allocation2 + $0x28] sm:$0xff] %v1229
    %1231 = vmatprep.subr.mxu0 %v121
    %1232 = vmatpush1.msra.mxu0 %v120
    %1233 = vmatprep.subr.mxu0 %v125
    %1234 = vmatpush1.msra.mxu0 %v124
    %1235 = vmatprep.subr.mxu0 %v129
    %1236 = vmatpush1.msra.mxu0 %v128
    %1237 = vmatprep.subr.mxu0 %v133
    %1238 = vmatpush1.msra.mxu0 %v132
    %1239 = vmatprep.subr.mxu0 %v137
    %1240 = vmatpush1.msra.mxu0 %v136
    %1241 = vmatprep.subr.mxu0 %v141
    %1242 = vmatpush1.msra.mxu0 %v140
    %1243 = vmatprep.subr.mxu0 %v145
    %1244 = vmatpush1.msra.mxu0 %v144
    %1245 = vmatprep.subr.mxu0 %v149
    %1246 = vmatpush1.msra.mxu0 %v148
    %1247 = vmatprep.subr.mxu0 %v153
    %1248 = vmatpush1.msra.mxu0 %v152
    %1249 = vmatprep.subr.mxu0 %v157
    %1250 = vmatpush1.msra.mxu0 %v156
    %1251 = vmatprep.subr.mxu0 %v161
    %1252 = vmatpush1.msra.mxu0 %v160
    %1253 = vmatprep.subr.mxu0 %v165
    %1254 = vmatpush1.msra.mxu0 %v164
    %1255 = vmatprep.subr.mxu0 %v169
    %1256 = vmatpush1.msra.mxu0 %v168
    %1257 = vmatprep.subr.mxu0 %v173
    %1258 = vmatpush1.msra.mxu0 %v172
    %1259 = vmatprep.subr.mxu0 %v177
    %1260 = vmatpush1.msra.mxu0 %v176
    %1261 = vmatprep.subr.mxu0 %v181
    %1262 = vmatpush1.msra.mxu0 %v180
    %1263 = vmatprep.subr.mxu0 0.0
    %1264 = vmatpush1.msra.mxu0 0.0
    %1265 = vmatprep.subr.mxu0 0.0
    %1266 = vmatpush1.msra.mxu0 0.0
    %1267 = vmatprep.subr.mxu0 0.0
    %1268 = vmatpush1.msra.mxu0 0.0
    %1269 = vmatprep.subr.mxu0 0.0
    %1270 = vmatpush1.msra.mxu0 0.0
    %1271 = vmatprep.subr.mxu0 0.0
    %1272 = vmatpush1.msra.mxu0 0.0
    %1273 = vmatprep.subr.mxu0 0.0
    %1274 = vmatpush1.msra.mxu0 0.0
    %1275 = vmatprep.subr.mxu0 0.0
    %1276 = vmatpush1.msra.mxu0 0.0
    %1277 = vmatprep.subr.mxu0 0.0
    %1278 = vmatpush1.msra.mxu0 0.0
    %1279 = vmatprep.subr.mxu0 0.0
    %1280 = vmatpush1.msra.mxu0 0.0
    %1281 = vmatprep.subr.mxu0 0.0
    %1282 = vmatpush1.msra.mxu0 0.0
    %1283 = vmatprep.subr.mxu0 0.0
    %1284 = vmatpush1.msra.mxu0 0.0
    %1285 = vmatprep.subr.mxu0 0.0
    %1286 = vmatpush1.msra.mxu0 0.0
    %1287 = vmatprep.subr.mxu0 0.0
    %1288 = vmatpush1.msra.mxu0 0.0
    %1289 = vmatprep.subr.mxu0 0.0
    %1290 = vmatpush1.msra.mxu0 0.0
    %1291 = vmatprep.subr.mxu0 0.0
    %1292 = vmatpush1.msra.mxu0 0.0
    %1293 = vmatprep.subr.mxu0 0.0
    %1294 = vmatpush1.msra.mxu0 0.0
    %1295 = vmatprep.mubr.f32.mxu0 0.0
    %1296 = vmatmul.mubr.f32.gmra.mrb[0].mxu0 %v1229
    %v1297 = vpop.f32.mrb[0].mxu0
    %v1298 = vadd.f32 %v211, %v1297
    %v1299 = vpop.f32.mrb[0].mxu0
    %v1300 = vadd.f32 %v215, %v1299
    %1301 = vdwg.mxu0
    %1302 = vmatprep.subr.mxu0 %v123
    %1303 = vmatpush1.msra.mxu0 %v122
    %1304 = vmatprep.subr.mxu0 %v127
    %1305 = vmatpush1.msra.mxu0 %v126
    %1306 = vmatprep.subr.mxu0 %v131
    %1307 = vmatpush1.msra.mxu0 %v130
    %1308 = vmatprep.subr.mxu0 %v135
    %1309 = vmatpush1.msra.mxu0 %v134
    %1310 = vmatprep.subr.mxu0 %v139
    %1311 = vmatpush1.msra.mxu0 %v138
    %1312 = vmatprep.subr.mxu0 %v143
    %1313 = vmatpush1.msra.mxu0 %v142
    %1314 = vmatprep.subr.mxu0 %v147
    %1315 = vmatpush1.msra.mxu0 %v146
    %1316 = vmatprep.subr.mxu0 %v151
    %1317 = vmatpush1.msra.mxu0 %v150
    %1318 = vmatprep.subr.mxu0 %v155
    %1319 = vmatpush1.msra.mxu0 %v154
    %1320 = vmatprep.subr.mxu0 %v159
    %1321 = vmatpush1.msra.mxu0 %v158
    %1322 = vmatprep.subr.mxu0 %v163
    %1323 = vmatpush1.msra.mxu0 %v162
    %1324 = vmatprep.subr.mxu0 %v167
    %1325 = vmatpush1.msra.mxu0 %v166
    %1326 = vmatprep.subr.mxu0 %v171
    %1327 = vmatpush1.msra.mxu0 %v170
    %1328 = vmatprep.subr.mxu0 %v175
    %1329 = vmatpush1.msra.mxu0 %v174
    %1330 = vmatprep.subr.mxu0 %v179
    %1331 = vmatpush1.msra.mxu0 %v178
    %1332 = vmatprep.subr.mxu0 %v183
    %1333 = vmatpush1.msra.mxu0 %v182
    %1334 = vmatprep.subr.mxu0 0.0
    %1335 = vmatpush1.msra.mxu0 0.0
    %1336 = vmatprep.subr.mxu0 0.0
    %1337 = vmatpush1.msra.mxu0 0.0
    %1338 = vmatprep.subr.mxu0 0.0
    %1339 = vmatpush1.msra.mxu0 0.0
    %1340 = vmatprep.subr.mxu0 0.0
    %1341 = vmatpush1.msra.mxu0 0.0
    %1342 = vmatprep.subr.mxu0 0.0
    %1343 = vmatpush1.msra.mxu0 0.0
    %1344 = vmatprep.subr.mxu0 0.0
    %1345 = vmatpush1.msra.mxu0 0.0
    %1346 = vmatprep.subr.mxu0 0.0
    %1347 = vmatpush1.msra.mxu0 0.0
    %1348 = vmatprep.subr.mxu0 0.0
    %1349 = vmatpush1.msra.mxu0 0.0
    %1350 = vmatprep.subr.mxu0 0.0
    %1351 = vmatpush1.msra.mxu0 0.0
    %1352 = vmatprep.subr.mxu0 0.0
    %1353 = vmatpush1.msra.mxu0 0.0
    %1354 = vmatprep.subr.mxu0 0.0
    %1355 = vmatpush1.msra.mxu0 0.0
    %1356 = vmatprep.subr.mxu0 0.0
    %1357 = vmatpush1.msra.mxu0 0.0
    %1358 = vmatprep.subr.mxu0 0.0
    %1359 = vmatpush1.msra.mxu0 0.0
    %1360 = vmatprep.subr.mxu0 0.0
    %1361 = vmatpush1.msra.mxu0 0.0
    %1362 = vmatprep.subr.mxu0 0.0
    %1363 = vmatpush1.msra.mxu0 0.0
    %1364 = vmatprep.subr.mxu0 0.0
    %1365 = vmatpush1.msra.mxu0 0.0
    %1366 = vmatprep.mubr.f32.mxu0 0.0
    %1367 = vmatmul.mubr.f32.gmra.mrb[0].mxu0 %v1229
    %v1368 = vpop.f32.mrb[0].mxu0
    %v1369 = vadd.f32 %v219, %v1368
    %v1370 = vpop.f32.mrb[0].mxu0
    %v1371 = vadd.f32 %v223, %v1370
    %1372 = vdwg.mxu0
    %v1373 = vxor.u32 %v1298, 2147483648
    %v1374 = vmul.f32 %v1373, 1.442695
    %v1375 = vpow.pop %v1374
    %v1376 = vadd.f32 %v1375, 1.0
    %v1377 = vrcp.pop %v1376
    %v1378 = vmul.f32 1.0, %v1377
    %v1379 = vxor.u32 %v1300, 2147483648
    %v1380 = vmul.f32 %v1379, 1.442695
    %v1381 = vpow.pop %v1380
    %v1382 = vadd.f32 %v1381, 1.0
    %v1383 = vrcp.pop %v1382
    %v1384 = vmul.f32 1.0, %v1383
    %v1385 = vtanh.pop %v1369
    %v1386 = vxor.u32 %v1371, 2147483648
    %v1387 = vmul.f32 %v1386, 1.442695
    %v1388 = vpow.pop %v1387
    %v1389 = vadd.f32 %v1388, 1.0
    %v1390 = vrcp.pop %v1389
    %v1391 = vmul.f32 1.0, %v1390
    %v1392 = vmul.f32 %v1384, %v1227
    %v1393 = vmul.f32 %v1378, %v1385
    %v1394 = vadd.f32 %v1392, %v1393
    %v1395 = vtanh.pop %v1394
    %v1396 = vmul.f32 %v1391, %v1395
    %1397 = vst [vmem:[#allocation2 + $0x30] sm:$0xff] %v1396
    %1398 = vmatprep.subr.mxu0 %v121
    %1399 = vmatpush1.msra.mxu0 %v120
    %1400 = vmatprep.subr.mxu0 %v125
    %1401 = vmatpush1.msra.mxu0 %v124
    %1402 = vmatprep.subr.mxu0 %v129
    %1403 = vmatpush1.msra.mxu0 %v128
    %1404 = vmatprep.subr.mxu0 %v133
    %1405 = vmatpush1.msra.mxu0 %v132
    %1406 = vmatprep.subr.mxu0 %v137
    %1407 = vmatpush1.msra.mxu0 %v136
    %1408 = vmatprep.subr.mxu0 %v141
    %1409 = vmatpush1.msra.mxu0 %v140
    %1410 = vmatprep.subr.mxu0 %v145
    %1411 = vmatpush1.msra.mxu0 %v144
    %1412 = vmatprep.subr.mxu0 %v149
    %1413 = vmatpush1.msra.mxu0 %v148
    %1414 = vmatprep.subr.mxu0 %v153
    %1415 = vmatpush1.msra.mxu0 %v152
    %1416 = vmatprep.subr.mxu0 %v157
    %1417 = vmatpush1.msra.mxu0 %v156
    %1418 = vmatprep.subr.mxu0 %v161
    %1419 = vmatpush1.msra.mxu0 %v160
    %1420 = vmatprep.subr.mxu0 %v165
    %1421 = vmatpush1.msra.mxu0 %v164
    %1422 = vmatprep.subr.mxu0 %v169
    %1423 = vmatpush1.msra.mxu0 %v168
    %1424 = vmatprep.subr.mxu0 %v173
    %1425 = vmatpush1.msra.mxu0 %v172
    %1426 = vmatprep.subr.mxu0 %v177
    %1427 = vmatpush1.msra.mxu0 %v176
    %1428 = vmatprep.subr.mxu0 %v181
    %1429 = vmatpush1.msra.mxu0 %v180
    %1430 = vmatprep.subr.mxu0 0.0
    %1431 = vmatpush1.msra.mxu0 0.0
    %1432 = vmatprep.subr.mxu0 0.0
    %1433 = vmatpush1.msra.mxu0 0.0
    %1434 = vmatprep.subr.mxu0 0.0
    %1435 = vmatpush1.msra.mxu0 0.0
    %1436 = vmatprep.subr.mxu0 0.0
    %1437 = vmatpush1.msra.mxu0 0.0
    %1438 = vmatprep.subr.mxu0 0.0
    %1439 = vmatpush1.msra.mxu0 0.0
    %1440 = vmatprep.subr.mxu0 0.0
    %1441 = vmatpush1.msra.mxu0 0.0
    %1442 = vmatprep.subr.mxu0 0.0
    %1443 = vmatpush1.msra.mxu0 0.0
    %1444 = vmatprep.subr.mxu0 0.0
    %1445 = vmatpush1.msra.mxu0 0.0
    %1446 = vmatprep.subr.mxu0 0.0
    %1447 = vmatpush1.msra.mxu0 0.0
    %1448 = vmatprep.subr.mxu0 0.0
    %1449 = vmatpush1.msra.mxu0 0.0
    %1450 = vmatprep.subr.mxu0 0.0
    %1451 = vmatpush1.msra.mxu0 0.0
    %1452 = vmatprep.subr.mxu0 0.0
    %1453 = vmatpush1.msra.mxu0 0.0
    %1454 = vmatprep.subr.mxu0 0.0
    %1455 = vmatpush1.msra.mxu0 0.0
    %1456 = vmatprep.subr.mxu0 0.0
    %1457 = vmatpush1.msra.mxu0 0.0
    %1458 = vmatprep.subr.mxu0 0.0
    %1459 = vmatpush1.msra.mxu0 0.0
    %1460 = vmatprep.subr.mxu0 0.0
    %1461 = vmatpush1.msra.mxu0 0.0
    %1462 = vmatprep.mubr.f32.mxu0 0.0
    %1463 = vmatmul.mubr.f32.gmra.mrb[0].mxu0 %v1396
    %v1464 = vpop.f32.mrb[0].mxu0
    %v1465 = vadd.f32 %v211, %v1464
    %v1466 = vpop.f32.mrb[0].mxu0
    %v1467 = vadd.f32 %v215, %v1466
    %1468 = vdwg.mxu0
    %1469 = vmatprep.subr.mxu0 %v123
    %1470 = vmatpush1.msra.mxu0 %v122
    %1471 = vmatprep.subr.mxu0 %v127
    %1472 = vmatpush1.msra.mxu0 %v126
    %1473 = vmatprep.subr.mxu0 %v131
    %1474 = vmatpush1.msra.mxu0 %v130
    %1475 = vmatprep.subr.mxu0 %v135
    %1476 = vmatpush1.msra.mxu0 %v134
    %1477 = vmatprep.subr.mxu0 %v139
    %1478 = vmatpush1.msra.mxu0 %v138
    %1479 = vmatprep.subr.mxu0 %v143
    %1480 = vmatpush1.msra.mxu0 %v142
    %1481 = vmatprep.subr.mxu0 %v147
    %1482 = vmatpush1.msra.mxu0 %v146
    %1483 = vmatprep.subr.mxu0 %v151
    %1484 = vmatpush1.msra.mxu0 %v150
    %1485 = vmatprep.subr.mxu0 %v155
    %1486 = vmatpush1.msra.mxu0 %v154
    %1487 = vmatprep.subr.mxu0 %v159
    %1488 = vmatpush1.msra.mxu0 %v158
    %1489 = vmatprep.subr.mxu0 %v163
    %1490 = vmatpush1.msra.mxu0 %v162
    %1491 = vmatprep.subr.mxu0 %v167
    %1492 = vmatpush1.msra.mxu0 %v166
    %1493 = vmatprep.subr.mxu0 %v171
    %1494 = vmatpush1.msra.mxu0 %v170
    %1495 = vmatprep.subr.mxu0 %v175
    %1496 = vmatpush1.msra.mxu0 %v174
    %1497 = vmatprep.subr.mxu0 %v179
    %1498 = vmatpush1.msra.mxu0 %v178
    %1499 = vmatprep.subr.mxu0 %v183
    %1500 = vmatpush1.msra.mxu0 %v182
    %1501 = vmatprep.subr.mxu0 0.0
    %1502 = vmatpush1.msra.mxu0 0.0
    %1503 = vmatprep.subr.mxu0 0.0
    %1504 = vmatpush1.msra.mxu0 0.0
    %1505 = vmatprep.subr.mxu0 0.0
    %1506 = vmatpush1.msra.mxu0 0.0
    %1507 = vmatprep.subr.mxu0 0.0
    %1508 = vmatpush1.msra.mxu0 0.0
    %1509 = vmatprep.subr.mxu0 0.0
    %1510 = vmatpush1.msra.mxu0 0.0
    %1511 = vmatprep.subr.mxu0 0.0
    %1512 = vmatpush1.msra.mxu0 0.0
    %1513 = vmatprep.subr.mxu0 0.0
    %1514 = vmatpush1.msra.mxu0 0.0
    %1515 = vmatprep.subr.mxu0 0.0
    %1516 = vmatpush1.msra.mxu0 0.0
    %1517 = vmatprep.subr.mxu0 0.0
    %1518 = vmatpush1.msra.mxu0 0.0
    %1519 = vmatprep.subr.mxu0 0.0
    %1520 = vmatpush1.msra.mxu0 0.0
    %1521 = vmatprep.subr.mxu0 0.0
    %1522 = vmatpush1.msra.mxu0 0.0
    %1523 = vmatprep.subr.mxu0 0.0
    %1524 = vmatpush1.msra.mxu0 0.0
    %1525 = vmatprep.subr.mxu0 0.0
    %1526 = vmatpush1.msra.mxu0 0.0
    %1527 = vmatprep.subr.mxu0 0.0
    %1528 = vmatpush1.msra.mxu0 0.0
    %1529 = vmatprep.subr.mxu0 0.0
    %1530 = vmatpush1.msra.mxu0 0.0
    %1531 = vmatprep.subr.mxu0 0.0
    %1532 = vmatpush1.msra.mxu0 0.0
    %1533 = vmatprep.mubr.f32.mxu0 0.0
    %1534 = vmatmul.mubr.f32.gmra.mrb[0].mxu0 %v1396
    %v1535 = vpop.f32.mrb[0].mxu0
    %v1536 = vadd.f32 %v219, %v1535
    %v1537 = vpop.f32.mrb[0].mxu0
    %v1538 = vadd.f32 %v223, %v1537
    %1539 = vdwg.mxu0
    %v1540 = vxor.u32 %v1465, 2147483648
    %v1541 = vmul.f32 %v1540, 1.442695
    %v1542 = vpow.pop %v1541
    %v1543 = vadd.f32 %v1542, 1.0
    %v1544 = vrcp.pop %v1543
    %v1545 = vmul.f32 1.0, %v1544
    %v1546 = vxor.u32 %v1467, 2147483648
    %v1547 = vmul.f32 %v1546, 1.442695
    %v1548 = vpow.pop %v1547
    %v1549 = vadd.f32 %v1548, 1.0
    %v1550 = vrcp.pop %v1549
    %v1551 = vmul.f32 1.0, %v1550
    %v1552 = vtanh.pop %v1536
    %v1553 = vxor.u32 %v1538, 2147483648
    %v1554 = vmul.f32 %v1553, 1.442695
    %v1555 = vpow.pop %v1554
    %v1556 = vadd.f32 %v1555, 1.0
    %v1557 = vrcp.pop %v1556
    %v1558 = vmul.f32 1.0, %v1557
    %v1559 = vmul.f32 %v1551, %v1394
    %v1560 = vmul.f32 %v1545, %v1552
    %v1561 = vadd.f32 %v1559, %v1560
    %v1562 = vtanh.pop %v1561
    %v1563 = vmul.f32 %v1558, %v1562
    %1564 = vst [vmem:[#allocation2 + $0x38] sm:$0xff] %v1563
    %v1565 = vld [vmem:[#allocation2] sm:$0xff]
    %v1566 = vld [vmem:[#allocation2 + $0x8] sm:$0xff]
    %v1567 = vld [vmem:[#allocation2 + $0x10] sm:$0xff]
    %v1568 = vld [vmem:[#allocation2 + $0x18] sm:$0xff]
    %v1569 = vld [vmem:[#allocation2 + $0x20] sm:$0xff]
    %v1570 = vld [vmem:[#allocation2 + $0x28] sm:$0xff]
    %v1571 = vld [vmem:[#allocation2 + $0x30] sm:$0xff]
    %v1572 = vld [vmem:[#allocation2 + $0x38] sm:$0xff]
    %v1573 = vld [vmem:[%s5] sm:$0xff]
    %v1574 = vld [vmem:[%s5 + $0x8] sm:$0xff]
    %v1575 = vld [vmem:[%s5 + $0x10] sm:$0xff]
    %v1576 = vld [vmem:[%s5 + $0x18] sm:$0xff]
    %v1577 = vld [vmem:[%s5 + $0x20] sm:$0xff]
    %v1578 = vld [vmem:[%s5 + $0x28] sm:$0xff]
    %v1579 = vld [vmem:[%s5 + $0x30] sm:$0xff]
    %v1580 = vld [vmem:[%s5 + $0x38] sm:$0xff]
    %v1581 = vld [vmem:[%s5 + $0x40] sm:$0xff]
    %v1582 = vld [vmem:[%s5 + $0x48] sm:$0xff]
    %v1583 = vld [vmem:[%s5 + $0x50] sm:$0xff]
    %v1584 = vld [vmem:[%s5 + $0x58] sm:$0xff]
    %v1585 = vld [vmem:[%s5 + $0x60] sm:$0xff]
    %v1586 = vld [vmem:[%s5 + $0x68] sm:$0xff]
    %v1587 = vld [vmem:[%s5 + $0x70] sm:$0xff]
    %v1588 = vld [vmem:[%s5 + $0x78] sm:$0xff]
    %v1589 = vld [vmem:[#allocation3] sm:$0x1]
    %v1591 = vlaneseq
    %v1592 = vshrl.u32 %v1591, 7
    %v1593 = vsub.s32 0, %v1592
    %v1594 = vrot.slane %v1589, %v1593
    %1596 = vmatprep.subr.mxu0 0.0
    %1597 = vmatpush1.msra.mxu0 %v1573
    %1598 = vmatprep.subr.mxu0 0.0
    %1599 = vmatpush1.msra.mxu0 %v1574
    %1600 = vmatprep.subr.mxu0 0.0
    %1601 = vmatpush1.msra.mxu0 %v1575
    %1602 = vmatprep.subr.mxu0 0.0
    %1603 = vmatpush1.msra.mxu0 %v1576
    %1604 = vmatprep.subr.mxu0 0.0
    %1605 = vmatpush1.msra.mxu0 %v1577
    %1606 = vmatprep.subr.mxu0 0.0
    %1607 = vmatpush1.msra.mxu0 %v1578
    %1608 = vmatprep.subr.mxu0 0.0
    %1609 = vmatpush1.msra.mxu0 %v1579
    %1610 = vmatprep.subr.mxu0 0.0
    %1611 = vmatpush1.msra.mxu0 %v1580
    %1612 = vmatprep.subr.mxu0 0.0
    %1613 = vmatpush1.msra.mxu0 %v1581
    %1614 = vmatprep.subr.mxu0 0.0
    %1615 = vmatpush1.msra.mxu0 %v1582
    %1616 = vmatprep.subr.mxu0 0.0
    %1617 = vmatpush1.msra.mxu0 %v1583
    %1618 = vmatprep.subr.mxu0 0.0
    %1619 = vmatpush1.msra.mxu0 %v1584
    %1620 = vmatprep.subr.mxu0 0.0
    %1621 = vmatpush1.msra.mxu0 %v1585
    %1622 = vmatprep.subr.mxu0 0.0
    %1623 = vmatpush1.msra.mxu0 %v1586
    %1624 = vmatprep.subr.mxu0 0.0
    %1625 = vmatpush1.msra.mxu0 %v1587
    %1626 = vmatprep.subr.mxu0 0.0
    %1627 = vmatpush1.msra.mxu0 %v1588
    %1628 = vmatprep.subr.mxu0 0.0
    %1629 = vmatpush1.msra.mxu0 0.0
    %1630 = vmatprep.subr.mxu0 0.0
    %1631 = vmatpush1.msra.mxu0 0.0
    %1632 = vmatprep.subr.mxu0 0.0
    %1633 = vmatpush1.msra.mxu0 0.0
    %1634 = vmatprep.subr.mxu0 0.0
    %1635 = vmatpush1.msra.mxu0 0.0
    %1636 = vmatprep.subr.mxu0 0.0
    %1637 = vmatpush1.msra.mxu0 0.0
    %1638 = vmatprep.subr.mxu0 0.0
    %1639 = vmatpush1.msra.mxu0 0.0
    %1640 = vmatprep.subr.mxu0 0.0
    %1641 = vmatpush1.msra.mxu0 0.0
    %1642 = vmatprep.subr.mxu0 0.0
    %1643 = vmatpush1.msra.mxu0 0.0
    %1644 = vmatprep.subr.mxu0 0.0
    %1645 = vmatpush1.msra.mxu0 0.0
    %1646 = vmatprep.subr.mxu0 0.0
    %1647 = vmatpush1.msra.mxu0 0.0
    %1648 = vmatprep.subr.mxu0 0.0
    %1649 = vmatpush1.msra.mxu0 0.0
    %1650 = vmatprep.subr.mxu0 0.0
    %1651 = vmatpush1.msra.mxu0 0.0
    %1652 = vmatprep.subr.mxu0 0.0
    %1653 = vmatpush1.msra.mxu0 0.0
    %1654 = vmatprep.subr.mxu0 0.0
    %1655 = vmatpush1.msra.mxu0 0.0
    %1656 = vmatprep.subr.mxu0 0.0
    %1657 = vmatpush1.msra.mxu0 0.0
    %1658 = vmatprep.subr.mxu0 0.0
    %1659 = vmatpush1.msra.mxu0 0.0
    %1660 = vmatprep.mubr.f32.mxu0 0.0
    %1661 = vmatmul.mubr.f32.gmra.mrb[0].mxu0 %v1565
    %v1662 = vpop.f32.mrb[0].mxu0
    %v1663 = vadd.f32 %v1594, %v1662
    %v1664 = vpop.f32.mrb[0].mxu0
    %1665 = vmatprep.mubr.f32.mxu0 0.0
    %1666 = vmatmul.mubr.f32.gmra.mrb[0].mxu0 %v1566
    %v1667 = vpop.f32.mrb[0].mxu0
    %v1668 = vadd.f32 %v1594, %v1667
    %v1669 = vpop.f32.mrb[0].mxu0
    %1670 = vmatprep.mubr.f32.mxu0 0.0
    %1671 = vmatmul.mubr.f32.gmra.mrb[0].mxu0 %v1567
    %v1672 = vpop.f32.mrb[0].mxu0
    %v1673 = vadd.f32 %v1594, %v1672
    %v1674 = vpop.f32.mrb[0].mxu0
    %1675 = vmatprep.mubr.f32.mxu0 0.0
    %1676 = vmatmul.mubr.f32.gmra.mrb[0].mxu0 %v1568
    %v1677 = vpop.f32.mrb[0].mxu0
    %v1678 = vadd.f32 %v1594, %v1677
    %v1679 = vpop.f32.mrb[0].mxu0
    %1680 = vmatprep.mubr.f32.mxu0 0.0
    %1681 = vmatmul.mubr.f32.gmra.mrb[0].mxu0 %v1569
    %v1682 = vpop.f32.mrb[0].mxu0
    %v1683 = vadd.f32 %v1594, %v1682
    %v1684 = vpop.f32.mrb[0].mxu0
    %1685 = vmatprep.mubr.f32.mxu0 0.0
    %1686 = vmatmul.mubr.f32.gmra.mrb[0].mxu0 %v1570
    %v1687 = vpop.f32.mrb[0].mxu0
    %v1688 = vadd.f32 %v1594, %v1687
    %v1689 = vpop.f32.mrb[0].mxu0
    %1690 = vmatprep.mubr.f32.mxu0 0.0
    %1691 = vmatmul.mubr.f32.gmra.mrb[0].mxu0 %v1571
    %v1692 = vpop.f32.mrb[0].mxu0
    %v1693 = vadd.f32 %v1594, %v1692
    %v1694 = vpop.f32.mrb[0].mxu0
    %1695 = vmatprep.mubr.f32.mxu0 0.0
    %1696 = vmatmul.mubr.f32.gmra.mrb[0].mxu0 %v1572
    %v1697 = vpop.f32.mrb[0].mxu0
    %v1698 = vadd.f32 %v1594, %v1697
    %v1699 = vpop.f32.mrb[0].mxu0
    %1700 = vdwg.mxu0
    %vm1701 = vcmask 7168
    %1702 = vst.msk [vmem:[%s7] sm:$0xff] %vm1701, %v1663
    %1703 = vst.msk [vmem:[%s7 + $0x8] sm:$0xff] %vm1701, %v1668
    %1704 = vst.msk [vmem:[%s7 + $0x10] sm:$0xff] %vm1701, %v1673
    %1705 = vst.msk [vmem:[%s7 + $0x18] sm:$0xff] %vm1701, %v1678
    %1706 = vst.msk [vmem:[%s7 + $0x20] sm:$0xff] %vm1701, %v1683
    %1707 = vst.msk [vmem:[%s7 + $0x28] sm:$0xff] %vm1701, %v1688
    %1708 = vst.msk [vmem:[%s7 + $0x30] sm:$0xff] %vm1701, %v1693
    %1709 = vst.msk [vmem:[%s7 + $0x38] sm:$0xff] %vm1701, %v1698
    // Predicated region
    $region38: #{tpu_custom_call.1} parent=1 // pred_check
      _
    $region39: #{tpu_custom_call.1} parent=1 // pred_check_branch
      %1711 = sbr.rel (0) target = $region41
    $region40: #{tpu_custom_call.1} parent=1 // pred_region
      _
    $region41: #{tpu_custom_call.1} parent=1 // pred_fallthru
      _
    // Predicated region
    $region42: #{tpu_custom_call.1} parent=1 // pred_check
      _
    $region43: #{tpu_custom_call.1} parent=1 // pred_check_branch
      %1713 = sbr.rel (0) target = $region45
    $region44: #{tpu_custom_call.1} parent=1 // pred_region
      _
    $region45: #{tpu_custom_call.1} parent=1 // pred_fallthru
      _
    %1714 = vsyncpa [#allocation5], 1
    %1715 = vsyncpa [#allocation7], 1

</llo_original>
